<compile_context>
chip_gen: v7x
topology: tpu7x:2x2x1
jax: 0.10.0
libtpu: 0.0.40
codegen_flags: <defaults>
</compile_context>

<pallas_src>
import functools

import jax
import jax.numpy as jnp
import numpy as np
from jax.experimental import pallas as pl
from jax.experimental.pallas import tpu as pltpu


# --------------------------------------------------------------------------- #
# Kernel
# --------------------------------------------------------------------------- #
def _fe_kernel(s_ref, x_ref, o_ref, *, c, precision):
    """One (F_blk, T_blk) tile of FE.

    s_ref : (2, T_blk, 2*T_blk)  resident 0/1 selection matrices (re, im)
    x_ref : (F_blk, 2*T_blk)     interleaved lanes [re0, im0, re1, im1, ...]
    o_ref : (2, T_blk, F_blk)    output tile (channel, time, freq)
    """
    f32 = jnp.float32
    x = x_ref[...]                     # (F_blk, 2*T_blk), input dtype
    s_re = s_ref[0]                    # (T_blk, 2*T_blk): row t selects lane 2t
    s_im = s_ref[1]                    # (T_blk, 2*T_blk): row t selects lane 2t+1

    # De-interleave + transpose in a single MXU op per channel:
    #   (T_blk, 2T) . (F_blk, 2T)^T -> (T_blk, F_blk).
    # Weights are exactly 0/1, so the matmul is a pure relayout.
    nt_dims = (((1,), (1,)), ((), ()))
    re = jax.lax.dot_general(s_re, x, nt_dims, precision=precision,
                             preferred_element_type=f32)      # (T_blk, F_blk)
    im = jax.lax.dot_general(s_im, x, nt_dims, precision=precision,
                             preferred_element_type=f32)      # (T_blk, F_blk)

    # scale = 1 / (mag^(1-c) + 1e-12) with mag = sqrt(re^2+im^2+1e-12), folded as
    # mag^(1-c) = exp(0.5*(1-c)*log(sumsq)): 2 EUP transcendentals + 1 divide.
    # sumsq >= 1e-12 so the log is always finite.
    sumsq = re * re + im * im + 1e-12
    denom = jnp.exp((0.5 * (1.0 - c)) * jnp.log(sumsq)) + 1e-12
    scale = 1.0 / denom

    o_ref[0, :, :] = (re * scale).astype(o_ref.dtype)
    o_ref[1, :, :] = (im * scale).astype(o_ref.dtype)


# --------------------------------------------------------------------------- #
# Host-side helpers
# --------------------------------------------------------------------------- #
_SEL_CACHE = {}
_PRECISION_CACHE = {}


def _pick_tile(n, multiple, max_tile):
    """Largest tile <= max_tile that divides n and is a multiple of `multiple`;
    falls back to the full dimension (always a legal Pallas block)."""
    if n <= max_tile or n % multiple != 0:
        return n
    t = (max_tile // multiple) * multiple
    while t > 0 and n % t != 0:
        t -= multiple
    return t if t > 0 else n


def _selection_matrices(t_blk, dtype):
    """Host-precomputed 0/1 de-interleave matrices, shape (2, t_blk, 2*t_blk).

    Passed as a kernel input with a constant index_map so they are DMA'd once
    and stay resident in VMEM for the whole grid (perf feedback #1)."""
    key = (int(t_blk), str(dtype))
    sel = _SEL_CACHE.get(key)
    if sel is None:
        t = np.arange(t_blk)
        s = np.zeros((2, t_blk, 2 * t_blk), dtype=np.float32)
        s[0, t, 2 * t] = 1.0        # real parts live on even lanes
        s[1, t, 2 * t + 1] = 1.0    # imag parts live on odd lanes
        sel = jnp.asarray(s, dtype=dtype)   # exact for f32 and bf16 (values are 0/1)
        _SEL_CACHE[key] = sel
    return sel


@functools.partial(jax.jit, static_argnames=("c", "precision", "f_blk", "t_blk"))
def _fe_call(x3, sel, *, c, precision, f_blk, t_blk):
    B, F, two_t = x3.shape
    T = two_t // 2
    grid = (B, F // f_blk, T // t_blk)
    kernel = functools.partial(_fe_kernel, c=c, precision=precision)
    return pl.pallas_call(
        kernel,
        out_shape=jax.ShapeDtypeStruct((B, 2, T, F), x3.dtype),
        grid=grid,
        in_specs=[
            # Selection matrices: constant block index -> fetched once, resident.
            pl.BlockSpec((2, t_blk, 2 * t_blk), lambda b, f, t: (0, 0, 0)),
            # Interleaved input tile: one contiguous lane-dense slab per step.
            pl.BlockSpec((None, f_blk, 2 * t_blk), lambda b, f, t: (b, f, t)),
        ],
        # Lane-dense output tile (last dim = f_blk, a multiple of 128 or full F).
        out_specs=pl.BlockSpec((None, 2, t_blk, f_blk), lambda b, f, t: (b, 0, t, f)),
        compiler_params=pltpu.CompilerParams(
            dimension_semantics=("parallel", "parallel", "parallel")),
    )(sel, x3)


def _choose_precision(x, x3, sel, c, f_blk, t_blk):
    """Pick the cheapest MXU precision that reproduces the reference.

    * bf16 data: one DEFAULT-precision bf16 pass is exact (weights are 0/1).
    * f32 data : try Precision.HIGH (3 bf16 passes); accept it only if the
      backend supports it AND it matches the pure-JAX reference within
      tolerance, otherwise fall back to HIGHEST (fp32 contraction, exact).
    Resolved once per (dtype, tiling) and cached.
    """
    if x.dtype == jnp.bfloat16:
        return jax.lax.Precision.DEFAULT
    key = (str(x.dtype), int(f_blk), int(t_blk))
    cached = _PRECISION_CACHE.get(key)
    if cached is not None:
        return cached
    chosen = jax.lax.Precision.HIGHEST
    try:
        cand = jax.lax.Precision.HIGH
        out = np.asarray(jax.block_until_ready(
            _fe_call(x3, sel, c=c, precision=cand, f_blk=f_blk, t_blk=t_blk)))
        ref = np.asarray(fe_reference(x, c=c))
        if np.allclose(out, ref, atol=2e-5, rtol=1e-3):
            chosen = cand
    except Exception:
        # Backend rejected Precision.HIGH -> keep the exact fp32-contraction path.
        pass
    _PRECISION_CACHE[key] = chosen
    return chosen


# --------------------------------------------------------------------------- #
# Public entry point
# --------------------------------------------------------------------------- #
def fe_forward(x, *, c=0.3):
    """Pallas implementation of FE.forward: x (B, F, T, 2) -> (B, 2, T, F)."""
    B, F, T, two = x.shape
    assert two == 2, "last dim of x must be (real, imag)"
    c = float(c)

    # Free view: lane k of the last dim is (t = k // 2, ch = k % 2).
    x3 = x.reshape(B, F, 2 * T)

    # F tile: output lane dim -> multiple of 128 (or full F), capped at 1024.
    # T tile: contraction length is 2*t_blk; 64 keeps even the fp32-precision
    #         MXU relayout under the HBM roofline on every generation (v5e incl.)
    #         while 2*t_blk = 128 stays lane-aligned.
    # Per-step working set (in + out, double-buffered) is ~2-4 MiB -- well under
    # the scoped-VMEM limit on v5e/v6e/v7x.
    f_blk = _pick_tile(F, 128, 1024)
    t_blk = _pick_tile(T, 64, 64)

    sel = _selection_matrices(t_blk, x.dtype)
    prec = _choose_precision(x, x3, sel, c, f_blk, t_blk)
    return _fe_call(x3, sel, c=c, precision=prec, f_blk=f_blk, t_blk=t_blk)


def fe_reference(x, *, c=0.3):
    """Pure-JAX reference mirroring the PyTorch FE.forward."""
    x_mag = jnp.sqrt(x[..., 0:1] ** 2 + x[..., 1:2] ** 2 + 1e-12)
    x_c = x / (jnp.power(x_mag, 1.0 - c) + 1e-12)
    return jnp.transpose(x_c, (0, 3, 2, 1))


if __name__ == "__main__":
    B, F, T = 2, 256, 128          # small complex spectrogram: (B, F, T, 2)
    c = 0.3
    x = jax.random.normal(jax.random.PRNGKey(0), (B, F, T, 2), dtype=jnp.float32)

    y = fe_forward(x, c=c)
    y = jax.block_until_ready(y)
    assert y.shape == (B, 2, T, F)

    y_ref = fe_reference(x, c=c)
    if not np.allclose(np.asarray(y), np.asarray(y_ref), atol=2e-5, rtol=1e-3):
        err = float(np.max(np.abs(np.asarray(y) - np.asarray(y_ref))))
        raise AssertionError(f"Pallas FE output mismatch vs reference (max abs err {err:.3e})")
    print("KERNEL_OK")
</pallas_src>

<mosaic_0001>
module attributes {stable_mosaic.version = 11 : i64} {
  func.func @_fe_kernel(%arg0: i32, %arg1: i32, %arg2: i32, %arg3: memref<2x64x128xf32, #tpu.memory_space<vmem>>, %arg4: memref<1x256x128xf32, #tpu.memory_space<vmem>>, %arg5: memref<1x2x64x256xf32, #tpu.memory_space<vmem>>) attributes {dimension_semantics = [#tpu.dimension_semantics<parallel>, #tpu.dimension_semantics<parallel>, #tpu.dimension_semantics<parallel>], iteration_bounds = array<i64: 2, 1, 2>, scalar_prefetch = 0 : i64, scratch_operands = 0 : i64, tpu.core_type = #tpu.core_type<tc>, window_params = [{pipeline_mode = #tpu.pipeline_mode<synchronous>, transform_indices = @transform_0, window_bounds = array<i64: 2, 64, 128>}, {transform_indices = @transform_1, window_bounds = array<i64: 1, 256, 128>}, {transform_indices = @transform_2, window_bounds = array<i64: 1, 2, 64, 256>}]} {
    %c0 = arith.constant 0 : index
    %c0_0 = arith.constant 0 : index
    %c0_1 = arith.constant 0 : index
    %0 = vector.load %arg4[%c0, %c0_0, %c0_1] : memref<1x256x128xf32, #tpu.memory_space<vmem>>, vector<1x256x128xf32>
    %1 = vector.shape_cast %0 : vector<1x256x128xf32> to vector<256x128xf32>
    %c0_2 = arith.constant 0 : index
    %c0_3 = arith.constant 0 : index
    %c0_4 = arith.constant 0 : index
    %2 = vector.load %arg3[%c0_2, %c0_3, %c0_4] : memref<2x64x128xf32, #tpu.memory_space<vmem>>, vector<1x64x128xf32>
    %3 = vector.shape_cast %2 : vector<1x64x128xf32> to vector<64x128xf32>
    %c1 = arith.constant 1 : index
    %c0_5 = arith.constant 0 : index
    %c0_6 = arith.constant 0 : index
    %4 = vector.load %arg3[%c1, %c0_5, %c0_6] : memref<2x64x128xf32, #tpu.memory_space<vmem>>, vector<1x64x128xf32>
    %5 = vector.shape_cast %4 : vector<1x64x128xf32> to vector<64x128xf32>
    %cst = arith.constant dense<0.000000e+00> : vector<64x256xf32>
    %6 = tpu.matmul %3, %1, %cst {dimension_numbers = #tpu.dot_dimension_numbers<[1], [1], [0], [0], [0, 0, 1, 0], [], []>, precision = #tpu.contract_precision<fp32>} : vector<64x128xf32>, vector<256x128xf32>, vector<64x256xf32> -> vector<64x256xf32>
    %cst_7 = arith.constant dense<0.000000e+00> : vector<64x256xf32>
    %7 = tpu.matmul %5, %1, %cst_7 {dimension_numbers = #tpu.dot_dimension_numbers<[1], [1], [0], [0], [0, 0, 1, 0], [], []>, precision = #tpu.contract_precision<fp32>} : vector<64x128xf32>, vector<256x128xf32>, vector<64x256xf32> -> vector<64x256xf32>
    %8 = arith.mulf %6, %6 : vector<64x256xf32>
    %9 = arith.mulf %7, %7 : vector<64x256xf32>
    %10 = arith.addf %8, %9 : vector<64x256xf32>
    %cst_8 = arith.constant 9.99999996E-13 : f32
    %11 = vector.broadcast %cst_8 : f32 to vector<64x256xf32>
    %12 = arith.addf %10, %11 : vector<64x256xf32>
    %13 = math.log %12 : vector<64x256xf32>
    %cst_9 = arith.constant 3.500000e-01 : f32
    %14 = vector.broadcast %cst_9 : f32 to vector<64x256xf32>
    %15 = arith.mulf %14, %13 : vector<64x256xf32>
    %16 = math.exp %15 : vector<64x256xf32>
    %cst_10 = arith.constant 9.99999996E-13 : f32
    %17 = vector.broadcast %cst_10 : f32 to vector<64x256xf32>
    %18 = arith.addf %16, %17 : vector<64x256xf32>
    %cst_11 = arith.constant 1.000000e+00 : f32
    %19 = vector.broadcast %cst_11 : f32 to vector<64x256xf32>
    %20 = arith.divf %19, %18 : vector<64x256xf32>
    %21 = arith.mulf %6, %20 : vector<64x256xf32>
    %c0_12 = arith.constant 0 : index
    %c0_13 = arith.constant 0 : index
    %c0_14 = arith.constant 0 : index
    %c0_15 = arith.constant 0 : index
    %22 = vector.load %arg5[%c0_12, %c0_13, %c0_14, %c0_15] : memref<1x2x64x256xf32, #tpu.memory_space<vmem>>, vector<1x1x64x256xf32>
    %23 = vector.shape_cast %22 : vector<1x1x64x256xf32> to vector<64x256xf32>
    %24 = vector.shape_cast %21 : vector<64x256xf32> to vector<1x1x64x256xf32>
    tpu.vector_store %arg5[%c0_12, %c0_13, %c0_14, %c0_15], %24 {strides = array<i32>} : memref<1x2x64x256xf32, #tpu.memory_space<vmem>>, vector<1x1x64x256xf32>,
    %25 = arith.mulf %7, %20 : vector<64x256xf32>
    %c0_16 = arith.constant 0 : index
    %c1_17 = arith.constant 1 : index
    %c0_18 = arith.constant 0 : index
    %c0_19 = arith.constant 0 : index
    %26 = vector.load %arg5[%c0_16, %c1_17, %c0_18, %c0_19] : memref<1x2x64x256xf32, #tpu.memory_space<vmem>>, vector<1x1x64x256xf32>
    %27 = vector.shape_cast %26 : vector<1x1x64x256xf32> to vector<64x256xf32>
    %28 = vector.shape_cast %25 : vector<64x256xf32> to vector<1x1x64x256xf32>
    tpu.vector_store %arg5[%c0_16, %c1_17, %c0_18, %c0_19], %28 {strides = array<i32>} : memref<1x2x64x256xf32, #tpu.memory_space<vmem>>, vector<1x1x64x256xf32>,
    return
  }
  func.func @transform_0(%arg0: i32, %arg1: i32, %arg2: i32) -> (i32, i32, i32) {
    %c0_i32 = arith.constant 0 : i32
    %c0_i32_0 = arith.constant 0 : i32
    %c0_i32_1 = arith.constant 0 : i32
    %c0_i32_2 = arith.constant 0 : i32
    return %c0_i32, %c0_i32_0, %c0_i32_1 : i32, i32, i32
  }
  func.func @transform_1(%arg0: i32, %arg1: i32, %arg2: i32) -> (i32, i32, i32) {
    %c0_i32 = arith.constant 0 : i32
    return %arg0, %arg1, %arg2 : i32, i32, i32
  }
  func.func @transform_2(%arg0: i32, %arg1: i32, %arg2: i32) -> (i32, i32, i32, i32) {
    %c0_i32 = arith.constant 0 : i32
    %c0_i32_0 = arith.constant 0 : i32
    return %arg0, %c0_i32, %arg2, %arg1 : i32, i32, i32, i32
  }
}

</mosaic_0001>

<llo_original>
// kernel: _fe_call.1
$region0: #{_fe_call.1}
  #allocation0 [shape = 'u32[]', space=smem, size = 0x4, offset = 0x4, fixed_abs, tag = 'smem constant byte address 0x4 - core index']
  #allocation1 [shape = 'u32[144,128]{1,0:T(1,128)}', space=vmem, size = 0x12000, scoped, tag = 'internal scratch']
  #allocation8 [shape = 's32[]', space=sflag, size = 0x4, offset = 0, fixed_abs, tag = 'sflag constant byte address 0x0 - dummy sync flag']
  %s0 = inlined_call_operand.hbm [shape: f32[2,64,128], index: 0, kind: input, shape index: {}]
  %s1 = inlined_call_operand.hbm [shape: f32[2,256,256], index: 1, kind: input, shape index: {}]
  %s2 = inlined_call_operand.hbm [shape: f32[2,2,128,256], index: 2, kind: output, shape index: {}]
  %s3 = sld [smem:[#allocation0]]
  $region49: #{_fe_call.1} parent=0
    _
  %s5 = ssub.s32 1, %s3
  %s6 = scalar_select 0, %s5, %s3
  $region1: #{_fe_call.1} parent=0
    #allocation2 [shape = 'u8[65536]{0}', space=vmem, size = 0x10000, scoped, tag = 'input window, operand 0, single buffered']
    #allocation3 [shape = 's32[2]{0}', space=sflag, size = 0x8, scoped, tag = 'scoped memory for _fe_call.1']
    #allocation4 [shape = 's32[2]{0}', space=sflag, size = 0x8, scoped, tag = 'scoped memory for _fe_call.1']
    #allocation5 [shape = 'u8[262144]{0}', space=vmem, size = 0x40000, scoped, tag = 'input window, operand 1']
    #allocation6 [shape = 's32[2]{0}', space=sflag, size = 0x8, scoped, tag = 'scoped memory for _fe_call.1']
    #allocation7 [shape = 'u8[262144]{0}', space=vmem, size = 0x40000, scoped, tag = 'output window, operand 0']
    %7 = vsyncpa [#allocation3], 0
    %8 = vsyncpa [#allocation6], 0
    %s9 = scalar_lea.sflag [#allocation6], 1
    %10 = vsyncpa %s9, 0
    %11 = vsyncpa [#allocation4], 0
    %s12 = scalar_lea.sflag [#allocation4], 1
    %13 = vsyncpa %s12, 0
    loop: start=0, step=1, limit=6
    $region2: #{_fe_call.1} parent=1 // loop_pre_header
      _
    $region3: #{_fe_call.1} parent=1 // loop_header
      %s15 = sphi 0, %s19
      %p16 = scmp.ge.s32.totalorder %s15, 6
      %s22 = sphi 0, %s41
      %s23 = sphi 0, %s37
      %s24 = sphi 0, %s33
      %s25 = sphi 0, %s22
      %s26 = sphi 0, %s23
      %s27 = sphi 0, %s24
      %s28 = sphi 0, %s25
      %s29 = sphi 0, %s26
      %s30 = sphi 0, %s27
      %s42 = sphi 0, %s42
      %s44 = sphi 0, %s42
      %s45 = sphi 0, %s44
      %s59 = sphi 0, %s45
      %s69 = sphi 0, %s71
      %s72 = sphi 0, %s69
      %s73 = sphi 0, %s72
      %s89 = sphi 0, %s73
      %s99 = sphi 0, %s101
      %s102 = sphi 0, %s99
      %s103 = sphi 0, %s102
      %s119 = sphi 0, %s103
    $region4: #{_fe_call.1} parent=1 // loop_header_branch
      %18 = sbr.rel (%p16) target = $region8
    $region5: #{_fe_call.1} parent=1 // loop_body
      %s20 = ssub.s32 %s15, 1
      %s21 = ssub.s32 %s15, 2
      %s31 = sadd.s32 1, %s24
      %p32 = scmp.ge.s32.totalorder %s31, 2
      %s33 = scalar_select %p32, 0, %s31
      %s34 = sadd.s32 1, %s23
      %s35 = scalar_select %p32, %s34, %s23
      %p36 = scmp.ge.s32.totalorder %s35, 1
      %s37 = scalar_select %p36, 0, %s35
      %s38 = sadd.s32 1, %s22
      %s39 = scalar_select %p36, %s38, %s22
      %p40 = scmp.ge.s32.totalorder %s39, 2
      %s41 = scalar_select %p40, 0, %s39
      %s43 = sadd.s32 %s42, 1
      %p46 = scmp.eq.s32.totalorder %s15, 3
      %p47 = scmp.ne.s32.totalorder %s42, %s44
      %p48 = scmp.eq.s32.totalorder %s15, 0
      %p49 = por %p47, %p48
      %p50 = scmp.ne.s32.totalorder %s42, %s44
      %p51 = scmp.eq.s32.totalorder %s20, 3
      %p52 = por %p50, %p51
      %p53 = scmp.ne.s32.totalorder %s44, %s45
      %p54 = scmp.eq.s32.totalorder %s20, 0
      %p55 = por %p53, %p54
      %p56 = scmp.ne.s32.totalorder %s44, %s45
      %p57 = scmp.eq.s32.totalorder %s21, 3
      %p58 = por %p56, %p57
      %p60 = scmp.ne.s32.totalorder %s45, %s59
      %p61 = scmp.eq.s32.totalorder %s21, 0
      %p62 = por %p60, %p61
      %s63 = ssub.s32 %s22, %s41
      %s64 = ssub.s32 %s23, %s37
      %s65 = sor.u32 %s63, %s64
      %s66 = ssub.s32 %s24, %s33
      %s67 = sor.u32 %s65, %s66
      %p68 = scmp.eq.s32.totalorder %s67, 0
      %s70 = sadd.s32 %s69, 1
      %s71 = scalar_select %p68, %s69, %s70
      %p74 = pneg %p68
      %p75 = scmp.eq.s32.totalorder %s15, 3
      %p76 = por %p74, %p75
      %p77 = scmp.ne.s32.totalorder %s69, %s72
      %p78 = scmp.eq.s32.totalorder %s15, 0
      %p79 = por %p77, %p78
      %p80 = scmp.ne.s32.totalorder %s69, %s72
      %p81 = scmp.eq.s32.totalorder %s20, 3
      %p82 = por %p80, %p81
      %p83 = scmp.ne.s32.totalorder %s72, %s73
      %p84 = scmp.eq.s32.totalorder %s20, 0
      %p85 = por %p83, %p84
      %p86 = scmp.ne.s32.totalorder %s72, %s73
      %p87 = scmp.eq.s32.totalorder %s21, 3
      %p88 = por %p86, %p87
      %p90 = scmp.ne.s32.totalorder %s73, %s89
      %p91 = scmp.eq.s32.totalorder %s21, 0
      %p92 = por %p90, %p91
      %s93 = ssub.s32 %s22, %s41
      %s94 = ssub.s32 %s24, %s33
      %s95 = sor.u32 %s93, %s94
      %s96 = ssub.s32 %s23, %s37
      %s97 = sor.u32 %s95, %s96
      %p98 = scmp.eq.s32.totalorder %s97, 0
      %s100 = sadd.s32 %s99, 1
      %s101 = scalar_select %p98, %s99, %s100
      %p104 = pneg %p98
      %p105 = scmp.eq.s32.totalorder %s15, 3
      %p106 = por %p104, %p105
      %p107 = scmp.ne.s32.totalorder %s99, %s102
      %p108 = scmp.eq.s32.totalorder %s15, 0
      %p109 = por %p107, %p108
      %p110 = scmp.ne.s32.totalorder %s99, %s102
      %p111 = scmp.eq.s32.totalorder %s20, 3
      %p112 = por %p110, %p111
      %p113 = scmp.ne.s32.totalorder %s102, %s103
      %p114 = scmp.eq.s32.totalorder %s20, 0
      %p115 = por %p113, %p114
      %p116 = scmp.ne.s32.totalorder %s102, %s103
      %p117 = scmp.eq.s32.totalorder %s21, 3
      %p118 = por %p116, %p117
      %p120 = scmp.ne.s32.totalorder %s103, %s119
      %p121 = scmp.eq.s32.totalorder %s21, 0
      %p122 = por %p120, %p121
      %p123 = scmp.le.s32.totalorder 1, %s15
      %p124 = scmp.lt.s32.totalorder %s15, 5
      %p125 = pnand %p123, %p124
      %p126 = pneg %p125
      // Predicated region
      $region9: #{_fe_call.1} parent=5 // pred_check
        _
      $region10: #{_fe_call.1} parent=5 // pred_check_branch
        %128 = sbr.rel (%p125) target = $region12
      $region11: #{_fe_call.1} parent=5 // pred_region
        %s129 = ssub.s32 %s15, 1
        // Predicated region
        $region13: #{_fe_call.1} parent=11 // pred_check
          %p130 = pneg %p55
        $region14: #{_fe_call.1} parent=11 // pred_check_branch
          %132 = sbr.rel (%p130) target = $region16
        $region15: #{_fe_call.1} parent=11 // pred_region
          %s134 = ssub.s32 2048, 2048
          %135 = vsyncadd [#allocation3], %s134
          %s136 = sshll.u32 [#allocation2], 4
          %s137 = int_to_ptr.vmem [resolvable:$true] %s136
          %142 = dma.hbm_to_vmem [thread:$0]  %s0, 2048, %s137, [#allocation3], 128, 128, 8
        $region16: #{_fe_call.1} parent=11 // pred_fallthru
          _
      $region12: #{_fe_call.1} parent=5 // pred_fallthru
        _
      %p143 = scmp.lt.s32.totalorder %s15, 4
      // Predicated region
      $region17: #{_fe_call.1} parent=5 // pred_check
        %p144 = pneg %p143
      $region18: #{_fe_call.1} parent=5 // pred_check_branch
        %146 = sbr.rel (%p144) target = $region20
      $region19: #{_fe_call.1} parent=5 // pred_region
        // Predicated region
        $region21: #{_fe_call.1} parent=19 // pred_check
          %p147 = pneg %p79
        $region22: #{_fe_call.1} parent=19 // pred_check_branch
          %149 = sbr.rel (%p147) target = $region24
        $region23: #{_fe_call.1} parent=19 // pred_region
          %s150 = sand.u32 %s69, 1
          %s151 = scalar_lea.sflag [#allocation6], %s150
          %s152 = sand.u32 %s69, 1
          %s153 = smul.addr %s152, 256
          %s154 = scalar_lea.vmem [#allocation5], %s153
          %s155 = smul.u32 32, %s23
          %s157 = ssub.s32 4096, 4096
          %158 = vsyncadd %s151, %s157
          %s159 = smul.addr %s155, 2
          %s160 = sadd.s32 %s24, %s159
          %s161 = smul.addr %s22, 64
          %s162 = sadd.s32 %s160, %s161
          %s163 = smul.addr %s162, 128
          %s164 = scalar_lea.hbm %s1, %s163
          %s165 = sshll.u32 %s154, 4
          %s166 = int_to_ptr.vmem [resolvable:$true] %s165
          %171 = dma.hbm_to_vmem [thread:$0]  %s164, 4096, %s166, %s151, 256, 128, 8
        $region24: #{_fe_call.1} parent=19 // pred_fallthru
          _
      $region20: #{_fe_call.1} parent=5 // pred_fallthru
        _
      %p172 = scmp.le.s32.totalorder 1, %s15
      %p173 = scmp.lt.s32.totalorder %s15, 5
      %p174 = pnand %p172, %p173
      %p175 = pneg %p174
      // Predicated region
      $region25: #{_fe_call.1} parent=5 // pred_check
        _
      $region26: #{_fe_call.1} parent=5 // pred_check_branch
        %177 = sbr.rel (%p174) target = $region28
      $region27: #{_fe_call.1} parent=5 // pred_region
        %s178 = ssub.s32 %s15, 1
        // Predicated region
        $region29: #{_fe_call.1} parent=27 // pred_check
          %p179 = pneg %p55
        $region30: #{_fe_call.1} parent=27 // pred_check_branch
          %181 = sbr.rel (%p179) target = $region32
        $region31: #{_fe_call.1} parent=27 // pred_region
          %182 = dma.done [#allocation3], 2048
        $region32: #{_fe_call.1} parent=27 // pred_fallthru
          _
        %s183 = sand.u32 %s72, 1
        %s184 = scalar_lea.sflag [#allocation6], %s183
        %s185 = sand.u32 %s72, 1
        %s186 = smul.addr %s185, 256
        %s187 = scalar_lea.vmem [#allocation5], %s186
        // Predicated region
        $region33: #{_fe_call.1} parent=27 // pred_check
          %p188 = pneg %p85
        $region34: #{_fe_call.1} parent=27 // pred_check_branch
          %190 = sbr.rel (%p188) target = $region36
        $region35: #{_fe_call.1} parent=27 // pred_region
          %191 = dma.done %s184, 4096
        $region36: #{_fe_call.1} parent=27 // pred_fallthru
          _
        %p192 = pneg %p55
        %p193 = pneg %p52
        %s194 = sand.u32 %s72, 1
        %s195 = scalar_lea.sflag [#allocation6], %s194
        %s196 = sand.u32 %s72, 1
        %s197 = smul.addr %s196, 256
        %s198 = scalar_lea.vmem [#allocation5], %s197
        %p199 = pneg %p85
        %p200 = pneg %p82
        %p201 = pneg %p115
        %p202 = pneg %p112
        %s203 = sand.u32 %s102, 1
        %s204 = scalar_lea.sflag [#allocation4], %s203
        %s205 = sand.u32 %s102, 1
        %s206 = smul.addr %s205, 256
        %s207 = scalar_lea.vmem [#allocation7], %s206
        %s208 = smul.u32 32, %s26
        %s209 = smul.u32 8, %s27
        %s210 = smul.u32 2, %s26
        %v211 = vld [vmem:[%s187] sm:$0xff]
        %v212 = vld [vmem:[%s187 + $0x8] sm:$0xff]
        %v213 = vld [vmem:[%s187 + $0x10] sm:$0xff]
        %v214 = vld [vmem:[%s187 + $0x18] sm:$0xff]
        %v215 = vld [vmem:[%s187 + $0x20] sm:$0xff]
        %v216 = vld [vmem:[%s187 + $0x28] sm:$0xff]
        %v217 = vld [vmem:[%s187 + $0x30] sm:$0xff]
        %v218 = vld [vmem:[%s187 + $0x38] sm:$0xff]
        %v219 = vld [vmem:[%s187 + $0x40] sm:$0xff]
        %v220 = vld [vmem:[%s187 + $0x48] sm:$0xff]
        %v221 = vld [vmem:[%s187 + $0x50] sm:$0xff]
        %v222 = vld [vmem:[%s187 + $0x58] sm:$0xff]
        %v223 = vld [vmem:[%s187 + $0x60] sm:$0xff]
        %v224 = vld [vmem:[%s187 + $0x68] sm:$0xff]
        %v225 = vld [vmem:[%s187 + $0x70] sm:$0xff]
        %v226 = vld [vmem:[%s187 + $0x78] sm:$0xff]
        %v227 = vld [vmem:[%s187 + $0x80] sm:$0xff]
        %v228 = vld [vmem:[%s187 + $0x88] sm:$0xff]
        %v229 = vld [vmem:[%s187 + $0x90] sm:$0xff]
        %v230 = vld [vmem:[%s187 + $0x98] sm:$0xff]
        %v231 = vld [vmem:[%s187 + $0xa0] sm:$0xff]
        %v232 = vld [vmem:[%s187 + $0xa8] sm:$0xff]
        %v233 = vld [vmem:[%s187 + $0xb0] sm:$0xff]
        %v234 = vld [vmem:[%s187 + $0xb8] sm:$0xff]
        %v235 = vld [vmem:[%s187 + $0xc0] sm:$0xff]
        %v236 = vld [vmem:[%s187 + $0xc8] sm:$0xff]
        %v237 = vld [vmem:[%s187 + $0xd0] sm:$0xff]
        %v238 = vld [vmem:[%s187 + $0xd8] sm:$0xff]
        %v239 = vld [vmem:[%s187 + $0xe0] sm:$0xff]
        %v240 = vld [vmem:[%s187 + $0xe8] sm:$0xff]
        %v241 = vld [vmem:[%s187 + $0xf0] sm:$0xff]
        %v242 = vld [vmem:[%s187 + $0xf8] sm:$0xff]
        %v243 = vld [vmem:[#allocation2] sm:$0xff]
        %v244 = vld [vmem:[#allocation2 + $0x8] sm:$0xff]
        %v245 = vld [vmem:[#allocation2 + $0x10] sm:$0xff]
        %v246 = vld [vmem:[#allocation2 + $0x18] sm:$0xff]
        %v247 = vld [vmem:[#allocation2 + $0x20] sm:$0xff]
        %v248 = vld [vmem:[#allocation2 + $0x28] sm:$0xff]
        %v249 = vld [vmem:[#allocation2 + $0x30] sm:$0xff]
        %v250 = vld [vmem:[#allocation2 + $0x38] sm:$0xff]
        %s251 = scalar_lea.vmem [#allocation2], 64
        %v252 = vld [vmem:[%s251] sm:$0xff]
        %v253 = vld [vmem:[%s251 + $0x8] sm:$0xff]
        %v254 = vld [vmem:[%s251 + $0x10] sm:$0xff]
        %v255 = vld [vmem:[%s251 + $0x18] sm:$0xff]
        %v256 = vld [vmem:[%s251 + $0x20] sm:$0xff]
        %v257 = vld [vmem:[%s251 + $0x28] sm:$0xff]
        %v258 = vld [vmem:[%s251 + $0x30] sm:$0xff]
        %v259 = vld [vmem:[%s251 + $0x38] sm:$0xff]
        %260 = vmatprep.subr.mxu0 0.0
        %v261 = vand.u32 %v211, 4294901760
        %262 = vmatpush1.xpose.msra.mxu0 %v261
        %263 = vmatprep.subr.mxu0 0.0
        %v264 = vand.u32 %v212, 4294901760
        %265 = vmatpush1.xpose.msra.mxu0 %v264
        %266 = vmatprep.subr.mxu0 0.0
        %v267 = vand.u32 %v213, 4294901760
        %268 = vmatpush1.xpose.msra.mxu0 %v267
        %269 = vmatprep.subr.mxu0 0.0
        %v270 = vand.u32 %v214, 4294901760
        %271 = vmatpush1.xpose.msra.mxu0 %v270
        %272 = vmatprep.subr.mxu0 0.0
        %v273 = vand.u32 %v215, 4294901760
        %274 = vmatpush1.xpose.msra.mxu0 %v273
        %275 = vmatprep.subr.mxu0 0.0
        %v276 = vand.u32 %v216, 4294901760
        %277 = vmatpush1.xpose.msra.mxu0 %v276
        %278 = vmatprep.subr.mxu0 0.0
        %v279 = vand.u32 %v217, 4294901760
        %280 = vmatpush1.xpose.msra.mxu0 %v279
        %281 = vmatprep.subr.mxu0 0.0
        %v282 = vand.u32 %v218, 4294901760
        %283 = vmatpush1.xpose.msra.mxu0 %v282
        %284 = vmatprep.subr.mxu0 0.0
        %v285 = vand.u32 %v219, 4294901760
        %286 = vmatpush1.xpose.msra.mxu0 %v285
        %287 = vmatprep.subr.mxu0 0.0
        %v288 = vand.u32 %v220, 4294901760
        %289 = vmatpush1.xpose.msra.mxu0 %v288
        %290 = vmatprep.subr.mxu0 0.0
        %v291 = vand.u32 %v221, 4294901760
        %292 = vmatpush1.xpose.msra.mxu0 %v291
        %293 = vmatprep.subr.mxu0 0.0
        %v294 = vand.u32 %v222, 4294901760
        %295 = vmatpush1.xpose.msra.mxu0 %v294
        %296 = vmatprep.subr.mxu0 0.0
        %v297 = vand.u32 %v223, 4294901760
        %298 = vmatpush1.xpose.msra.mxu0 %v297
        %299 = vmatprep.subr.mxu0 0.0
        %v300 = vand.u32 %v224, 4294901760
        %301 = vmatpush1.xpose.msra.mxu0 %v300
        %302 = vmatprep.subr.mxu0 0.0
        %v303 = vand.u32 %v225, 4294901760
        %304 = vmatpush1.xpose.msra.mxu0 %v303
        %305 = vmatprep.subr.mxu0 0.0
        %v306 = vand.u32 %v226, 4294901760
        %307 = vmatpush1.xpose.msra.mxu0 %v306
        %308 = vmatprep.subr.mxu0 0.0
        %v309 = vand.u32 %v227, 4294901760
        %310 = vmatpush1.xpose.msra.mxu0 %v309
        %311 = vmatprep.subr.mxu0 0.0
        %v312 = vand.u32 %v228, 4294901760
        %313 = vmatpush1.xpose.msra.mxu0 %v312
        %314 = vmatprep.subr.mxu0 0.0
        %v315 = vand.u32 %v229, 4294901760
        %316 = vmatpush1.xpose.msra.mxu0 %v315
        %317 = vmatprep.subr.mxu0 0.0
        %v318 = vand.u32 %v230, 4294901760
        %319 = vmatpush1.xpose.msra.mxu0 %v318
        %320 = vmatprep.subr.mxu0 0.0
        %v321 = vand.u32 %v231, 4294901760
        %322 = vmatpush1.xpose.msra.mxu0 %v321
        %323 = vmatprep.subr.mxu0 0.0
        %v324 = vand.u32 %v232, 4294901760
        %325 = vmatpush1.xpose.msra.mxu0 %v324
        %326 = vmatprep.subr.mxu0 0.0
        %v327 = vand.u32 %v233, 4294901760
        %328 = vmatpush1.xpose.msra.mxu0 %v327
        %329 = vmatprep.subr.mxu0 0.0
        %v330 = vand.u32 %v234, 4294901760
        %331 = vmatpush1.xpose.msra.mxu0 %v330
        %332 = vmatprep.subr.mxu0 0.0
        %v333 = vand.u32 %v235, 4294901760
        %334 = vmatpush1.xpose.msra.mxu0 %v333
        %335 = vmatprep.subr.mxu0 0.0
        %v336 = vand.u32 %v236, 4294901760
        %337 = vmatpush1.xpose.msra.mxu0 %v336
        %338 = vmatprep.subr.mxu0 0.0
        %v339 = vand.u32 %v237, 4294901760
        %340 = vmatpush1.xpose.msra.mxu0 %v339
        %341 = vmatprep.subr.mxu0 0.0
        %v342 = vand.u32 %v238, 4294901760
        %343 = vmatpush1.xpose.msra.mxu0 %v342
        %344 = vmatprep.subr.mxu0 0.0
        %v345 = vand.u32 %v239, 4294901760
        %346 = vmatpush1.xpose.msra.mxu0 %v345
        %347 = vmatprep.subr.mxu0 0.0
        %v348 = vand.u32 %v240, 4294901760
        %349 = vmatpush1.xpose.msra.mxu0 %v348
        %350 = vmatprep.subr.mxu0 0.0
        %v351 = vand.u32 %v241, 4294901760
        %352 = vmatpush1.xpose.msra.mxu0 %v351
        %353 = vmatprep.subr.mxu0 0.0
        %v354 = vand.u32 %v242, 4294901760
        %355 = vmatpush1.xpose.msra.mxu0 %v354
        %356 = vmatprep.mubr.f32.mxu0 0.0
        %v357 = vand.u32 %v243, 4294901760
        %v358 = vsub.f32 %v243, %v357
        %v359 = vand.u32 %v358, 4294901760
        %v360 = vsub.f32 %v358, %v359
        %v361 = vand.u32 %v360, 4294901760
        %362 = vmatmul.mubr.f32.gmra.mrb[0].mxu0 %v361
        %v363 = vpop.f32.mrb[0].mxu0
        %v364 = vadd.f32 0.0, %v363
        %v365 = vpop.f32.mrb[0].mxu0
        %v366 = vadd.f32 0.0, %v365
        %367 = vmatprep.mubr.f32.mxu0 0.0
        %v368 = vand.u32 %v244, 4294901760
        %v369 = vsub.f32 %v244, %v368
        %v370 = vand.u32 %v369, 4294901760
        %v371 = vsub.f32 %v369, %v370
        %v372 = vand.u32 %v371, 4294901760
        %373 = vmatmul.mubr.f32.gmra.mrb[0].mxu0 %v372
        %v374 = vpop.f32.mrb[0].mxu0
        %v375 = vadd.f32 0.0, %v374
        %v376 = vpop.f32.mrb[0].mxu0
        %v377 = vadd.f32 0.0, %v376
        %378 = vmatprep.mubr.f32.mxu0 0.0
        %v379 = vand.u32 %v245, 4294901760
        %v380 = vsub.f32 %v245, %v379
        %v381 = vand.u32 %v380, 4294901760
        %v382 = vsub.f32 %v380, %v381
        %v383 = vand.u32 %v382, 4294901760
        %384 = vmatmul.mubr.f32.gmra.mrb[0].mxu0 %v383
        %v385 = vpop.f32.mrb[0].mxu0
        %v386 = vadd.f32 0.0, %v385
        %v387 = vpop.f32.mrb[0].mxu0
        %v388 = vadd.f32 0.0, %v387
        %389 = vmatprep.mubr.f32.mxu0 0.0
        %v390 = vand.u32 %v246, 4294901760
        %v391 = vsub.f32 %v246, %v390
        %v392 = vand.u32 %v391, 4294901760
        %v393 = vsub.f32 %v391, %v392
        %v394 = vand.u32 %v393, 4294901760
        %395 = vmatmul.mubr.f32.gmra.mrb[0].mxu0 %v394
        %v396 = vpop.f32.mrb[0].mxu0
        %v397 = vadd.f32 0.0, %v396
        %v398 = vpop.f32.mrb[0].mxu0
        %v399 = vadd.f32 0.0, %v398
        %400 = vmatprep.mubr.f32.mxu0 0.0
        %v401 = vand.u32 %v247, 4294901760
        %v402 = vsub.f32 %v247, %v401
        %v403 = vand.u32 %v402, 4294901760
        %v404 = vsub.f32 %v402, %v403
        %v405 = vand.u32 %v404, 4294901760
        %406 = vmatmul.mubr.f32.gmra.mrb[0].mxu0 %v405
        %v407 = vpop.f32.mrb[0].mxu0
        %v408 = vadd.f32 0.0, %v407
        %v409 = vpop.f32.mrb[0].mxu0
        %v410 = vadd.f32 0.0, %v409
        %411 = vmatprep.mubr.f32.mxu0 0.0
        %v412 = vand.u32 %v248, 4294901760
        %v413 = vsub.f32 %v248, %v412
        %v414 = vand.u32 %v413, 4294901760
        %v415 = vsub.f32 %v413, %v414
        %v416 = vand.u32 %v415, 4294901760
        %417 = vmatmul.mubr.f32.gmra.mrb[0].mxu0 %v416
        %v418 = vpop.f32.mrb[0].mxu0
        %v419 = vadd.f32 0.0, %v418
        %v420 = vpop.f32.mrb[0].mxu0
        %v421 = vadd.f32 0.0, %v420
        %422 = vmatprep.mubr.f32.mxu0 0.0
        %v423 = vand.u32 %v249, 4294901760
        %v424 = vsub.f32 %v249, %v423
        %v425 = vand.u32 %v424, 4294901760
        %v426 = vsub.f32 %v424, %v425
        %v427 = vand.u32 %v426, 4294901760
        %428 = vmatmul.mubr.f32.gmra.mrb[0].mxu0 %v427
        %v429 = vpop.f32.mrb[0].mxu0
        %v430 = vadd.f32 0.0, %v429
        %v431 = vpop.f32.mrb[0].mxu0
        %v432 = vadd.f32 0.0, %v431
        %433 = vmatprep.mubr.f32.mxu0 0.0
        %v434 = vand.u32 %v250, 4294901760
        %v435 = vsub.f32 %v250, %v434
        %v436 = vand.u32 %v435, 4294901760
        %v437 = vsub.f32 %v435, %v436
        %v438 = vand.u32 %v437, 4294901760
        %439 = vmatmul.mubr.f32.gmra.mrb[0].mxu0 %v438
        %v440 = vpop.f32.mrb[0].mxu0
        %v441 = vadd.f32 0.0, %v440
        %v442 = vpop.f32.mrb[0].mxu0
        %v443 = vadd.f32 0.0, %v442
        %444 = vdwg.mxu0
        %445 = vmatprep.subr.mxu0 0.0
        %v446 = vand.u32 %v211, 4294901760
        %v447 = vsub.f32 %v211, %v446
        %v448 = vand.u32 %v447, 4294901760
        %v449 = vsub.f32 %v447, %v448
        %v450 = vand.u32 %v449, 4294901760
        %451 = vmatpush1.xpose.msra.mxu0 %v450
        %452 = vmatprep.subr.mxu0 0.0
        %v453 = vand.u32 %v212, 4294901760
        %v454 = vsub.f32 %v212, %v453
        %v455 = vand.u32 %v454, 4294901760
        %v456 = vsub.f32 %v454, %v455
        %v457 = vand.u32 %v456, 4294901760
        %458 = vmatpush1.xpose.msra.mxu0 %v457
        %459 = vmatprep.subr.mxu0 0.0
        %v460 = vand.u32 %v213, 4294901760
        %v461 = vsub.f32 %v213, %v460
        %v462 = vand.u32 %v461, 4294901760
        %v463 = vsub.f32 %v461, %v462
        %v464 = vand.u32 %v463, 4294901760
        %465 = vmatpush1.xpose.msra.mxu0 %v464
        %466 = vmatprep.subr.mxu0 0.0
        %v467 = vand.u32 %v214, 4294901760
        %v468 = vsub.f32 %v214, %v467
        %v469 = vand.u32 %v468, 4294901760
        %v470 = vsub.f32 %v468, %v469
        %v471 = vand.u32 %v470, 4294901760
        %472 = vmatpush1.xpose.msra.mxu0 %v471
        %473 = vmatprep.subr.mxu0 0.0
        %v474 = vand.u32 %v215, 4294901760
        %v475 = vsub.f32 %v215, %v474
        %v476 = vand.u32 %v475, 4294901760
        %v477 = vsub.f32 %v475, %v476
        %v478 = vand.u32 %v477, 4294901760
        %479 = vmatpush1.xpose.msra.mxu0 %v478
        %480 = vmatprep.subr.mxu0 0.0
        %v481 = vand.u32 %v216, 4294901760
        %v482 = vsub.f32 %v216, %v481
        %v483 = vand.u32 %v482, 4294901760
        %v484 = vsub.f32 %v482, %v483
        %v485 = vand.u32 %v484, 4294901760
        %486 = vmatpush1.xpose.msra.mxu0 %v485
        %487 = vmatprep.subr.mxu0 0.0
        %v488 = vand.u32 %v217, 4294901760
        %v489 = vsub.f32 %v217, %v488
        %v490 = vand.u32 %v489, 4294901760
        %v491 = vsub.f32 %v489, %v490
        %v492 = vand.u32 %v491, 4294901760
        %493 = vmatpush1.xpose.msra.mxu0 %v492
        %494 = vmatprep.subr.mxu0 0.0
        %v495 = vand.u32 %v218, 4294901760
        %v496 = vsub.f32 %v218, %v495
        %v497 = vand.u32 %v496, 4294901760
        %v498 = vsub.f32 %v496, %v497
        %v499 = vand.u32 %v498, 4294901760
        %500 = vmatpush1.xpose.msra.mxu0 %v499
        %501 = vmatprep.subr.mxu0 0.0
        %v502 = vand.u32 %v219, 4294901760
        %v503 = vsub.f32 %v219, %v502
        %v504 = vand.u32 %v503, 4294901760
        %v505 = vsub.f32 %v503, %v504
        %v506 = vand.u32 %v505, 4294901760
        %507 = vmatpush1.xpose.msra.mxu0 %v506
        %508 = vmatprep.subr.mxu0 0.0
        %v509 = vand.u32 %v220, 4294901760
        %v510 = vsub.f32 %v220, %v509
        %v511 = vand.u32 %v510, 4294901760
        %v512 = vsub.f32 %v510, %v511
        %v513 = vand.u32 %v512, 4294901760
        %514 = vmatpush1.xpose.msra.mxu0 %v513
        %515 = vmatprep.subr.mxu0 0.0
        %v516 = vand.u32 %v221, 4294901760
        %v517 = vsub.f32 %v221, %v516
        %v518 = vand.u32 %v517, 4294901760
        %v519 = vsub.f32 %v517, %v518
        %v520 = vand.u32 %v519, 4294901760
        %521 = vmatpush1.xpose.msra.mxu0 %v520
        %522 = vmatprep.subr.mxu0 0.0
        %v523 = vand.u32 %v222, 4294901760
        %v524 = vsub.f32 %v222, %v523
        %v525 = vand.u32 %v524, 4294901760
        %v526 = vsub.f32 %v524, %v525
        %v527 = vand.u32 %v526, 4294901760
        %528 = vmatpush1.xpose.msra.mxu0 %v527
        %529 = vmatprep.subr.mxu0 0.0
        %v530 = vand.u32 %v223, 4294901760
        %v531 = vsub.f32 %v223, %v530
        %v532 = vand.u32 %v531, 4294901760
        %v533 = vsub.f32 %v531, %v532
        %v534 = vand.u32 %v533, 4294901760
        %535 = vmatpush1.xpose.msra.mxu0 %v534
        %536 = vmatprep.subr.mxu0 0.0
        %v537 = vand.u32 %v224, 4294901760
        %v538 = vsub.f32 %v224, %v537
        %v539 = vand.u32 %v538, 4294901760
        %v540 = vsub.f32 %v538, %v539
        %v541 = vand.u32 %v540, 4294901760
        %542 = vmatpush1.xpose.msra.mxu0 %v541
        %543 = vmatprep.subr.mxu0 0.0
        %v544 = vand.u32 %v225, 4294901760
        %v545 = vsub.f32 %v225, %v544
        %v546 = vand.u32 %v545, 4294901760
        %v547 = vsub.f32 %v545, %v546
        %v548 = vand.u32 %v547, 4294901760
        %549 = vmatpush1.xpose.msra.mxu0 %v548
        %550 = vmatprep.subr.mxu0 0.0
        %v551 = vand.u32 %v226, 4294901760
        %v552 = vsub.f32 %v226, %v551
        %v553 = vand.u32 %v552, 4294901760
        %v554 = vsub.f32 %v552, %v553
        %v555 = vand.u32 %v554, 4294901760
        %556 = vmatpush1.xpose.msra.mxu0 %v555
        %557 = vmatprep.subr.mxu0 0.0
        %v558 = vand.u32 %v227, 4294901760
        %v559 = vsub.f32 %v227, %v558
        %v560 = vand.u32 %v559, 4294901760
        %v561 = vsub.f32 %v559, %v560
        %v562 = vand.u32 %v561, 4294901760
        %563 = vmatpush1.xpose.msra.mxu0 %v562
        %564 = vmatprep.subr.mxu0 0.0
        %v565 = vand.u32 %v228, 4294901760
        %v566 = vsub.f32 %v228, %v565
        %v567 = vand.u32 %v566, 4294901760
        %v568 = vsub.f32 %v566, %v567
        %v569 = vand.u32 %v568, 4294901760
        %570 = vmatpush1.xpose.msra.mxu0 %v569
        %571 = vmatprep.subr.mxu0 0.0
        %v572 = vand.u32 %v229, 4294901760
        %v573 = vsub.f32 %v229, %v572
        %v574 = vand.u32 %v573, 4294901760
        %v575 = vsub.f32 %v573, %v574
        %v576 = vand.u32 %v575, 4294901760
        %577 = vmatpush1.xpose.msra.mxu0 %v576
        %578 = vmatprep.subr.mxu0 0.0
        %v579 = vand.u32 %v230, 4294901760
        %v580 = vsub.f32 %v230, %v579
        %v581 = vand.u32 %v580, 4294901760
        %v582 = vsub.f32 %v580, %v581
        %v583 = vand.u32 %v582, 4294901760
        %584 = vmatpush1.xpose.msra.mxu0 %v583
        %585 = vmatprep.subr.mxu0 0.0
        %v586 = vand.u32 %v231, 4294901760
        %v587 = vsub.f32 %v231, %v586
        %v588 = vand.u32 %v587, 4294901760
        %v589 = vsub.f32 %v587, %v588
        %v590 = vand.u32 %v589, 4294901760
        %591 = vmatpush1.xpose.msra.mxu0 %v590
        %592 = vmatprep.subr.mxu0 0.0
        %v593 = vand.u32 %v232, 4294901760
        %v594 = vsub.f32 %v232, %v593
        %v595 = vand.u32 %v594, 4294901760
        %v596 = vsub.f32 %v594, %v595
        %v597 = vand.u32 %v596, 4294901760
        %598 = vmatpush1.xpose.msra.mxu0 %v597
        %599 = vmatprep.subr.mxu0 0.0
        %v600 = vand.u32 %v233, 4294901760
        %v601 = vsub.f32 %v233, %v600
        %v602 = vand.u32 %v601, 4294901760
        %v603 = vsub.f32 %v601, %v602
        %v604 = vand.u32 %v603, 4294901760
        %605 = vmatpush1.xpose.msra.mxu0 %v604
        %606 = vmatprep.subr.mxu0 0.0
        %v607 = vand.u32 %v234, 4294901760
        %v608 = vsub.f32 %v234, %v607
        %v609 = vand.u32 %v608, 4294901760
        %v610 = vsub.f32 %v608, %v609
        %v611 = vand.u32 %v610, 4294901760
        %612 = vmatpush1.xpose.msra.mxu0 %v611
        %613 = vmatprep.subr.mxu0 0.0
        %v614 = vand.u32 %v235, 4294901760
        %v615 = vsub.f32 %v235, %v614
        %v616 = vand.u32 %v615, 4294901760
        %v617 = vsub.f32 %v615, %v616
        %v618 = vand.u32 %v617, 4294901760
        %619 = vmatpush1.xpose.msra.mxu0 %v618
        %620 = vmatprep.subr.mxu0 0.0
        %v621 = vand.u32 %v236, 4294901760
        %v622 = vsub.f32 %v236, %v621
        %v623 = vand.u32 %v622, 4294901760
        %v624 = vsub.f32 %v622, %v623
        %v625 = vand.u32 %v624, 4294901760
        %626 = vmatpush1.xpose.msra.mxu0 %v625
        %627 = vmatprep.subr.mxu0 0.0
        %v628 = vand.u32 %v237, 4294901760
        %v629 = vsub.f32 %v237, %v628
        %v630 = vand.u32 %v629, 4294901760
        %v631 = vsub.f32 %v629, %v630
        %v632 = vand.u32 %v631, 4294901760
        %633 = vmatpush1.xpose.msra.mxu0 %v632
        %634 = vmatprep.subr.mxu0 0.0
        %v635 = vand.u32 %v238, 4294901760
        %v636 = vsub.f32 %v238, %v635
        %v637 = vand.u32 %v636, 4294901760
        %v638 = vsub.f32 %v636, %v637
        %v639 = vand.u32 %v638, 4294901760
        %640 = vmatpush1.xpose.msra.mxu0 %v639
        %641 = vmatprep.subr.mxu0 0.0
        %v642 = vand.u32 %v239, 4294901760
        %v643 = vsub.f32 %v239, %v642
        %v644 = vand.u32 %v643, 4294901760
        %v645 = vsub.f32 %v643, %v644
        %v646 = vand.u32 %v645, 4294901760
        %647 = vmatpush1.xpose.msra.mxu0 %v646
        %648 = vmatprep.subr.mxu0 0.0
        %v649 = vand.u32 %v240, 4294901760
        %v650 = vsub.f32 %v240, %v649
        %v651 = vand.u32 %v650, 4294901760
        %v652 = vsub.f32 %v650, %v651
        %v653 = vand.u32 %v652, 4294901760
        %654 = vmatpush1.xpose.msra.mxu0 %v653
        %655 = vmatprep.subr.mxu0 0.0
        %v656 = vand.u32 %v241, 4294901760
        %v657 = vsub.f32 %v241, %v656
        %v658 = vand.u32 %v657, 4294901760
        %v659 = vsub.f32 %v657, %v658
        %v660 = vand.u32 %v659, 4294901760
        %661 = vmatpush1.xpose.msra.mxu0 %v660
        %662 = vmatprep.subr.mxu0 0.0
        %v663 = vand.u32 %v242, 4294901760
        %v664 = vsub.f32 %v242, %v663
        %v665 = vand.u32 %v664, 4294901760
        %v666 = vsub.f32 %v664, %v665
        %v667 = vand.u32 %v666, 4294901760
        %668 = vmatpush1.xpose.msra.mxu0 %v667
        %669 = vmatprep.mubr.f32.mxu0 0.0
        %v670 = vand.u32 %v243, 4294901760
        %671 = vmatmul.mubr.f32.gmra.mrb[0].mxu0 %v670
        %v672 = vpop.f32.mrb[0].mxu0
        %v673 = vadd.f32 %v364, %v672
        %v674 = vpop.f32.mrb[0].mxu0
        %v675 = vadd.f32 %v366, %v674
        %676 = vmatprep.mubr.f32.mxu0 0.0
        %v677 = vand.u32 %v244, 4294901760
        %678 = vmatmul.mubr.f32.gmra.mrb[0].mxu0 %v677
        %v679 = vpop.f32.mrb[0].mxu0
        %v680 = vadd.f32 %v375, %v679
        %v681 = vpop.f32.mrb[0].mxu0
        %v682 = vadd.f32 %v377, %v681
        %683 = vmatprep.mubr.f32.mxu0 0.0
        %v684 = vand.u32 %v245, 4294901760
        %685 = vmatmul.mubr.f32.gmra.mrb[0].mxu0 %v684
        %v686 = vpop.f32.mrb[0].mxu0
        %v687 = vadd.f32 %v386, %v686
        %v688 = vpop.f32.mrb[0].mxu0
        %v689 = vadd.f32 %v388, %v688
        %690 = vmatprep.mubr.f32.mxu0 0.0
        %v691 = vand.u32 %v246, 4294901760
        %692 = vmatmul.mubr.f32.gmra.mrb[0].mxu0 %v691
        %v693 = vpop.f32.mrb[0].mxu0
        %v694 = vadd.f32 %v397, %v693
        %v695 = vpop.f32.mrb[0].mxu0
        %v696 = vadd.f32 %v399, %v695
        %697 = vmatprep.mubr.f32.mxu0 0.0
        %v698 = vand.u32 %v247, 4294901760
        %699 = vmatmul.mubr.f32.gmra.mrb[0].mxu0 %v698
        %v700 = vpop.f32.mrb[0].mxu0
        %v701 = vadd.f32 %v408, %v700
        %v702 = vpop.f32.mrb[0].mxu0
        %v703 = vadd.f32 %v410, %v702
        %704 = vmatprep.mubr.f32.mxu0 0.0
        %v705 = vand.u32 %v248, 4294901760
        %706 = vmatmul.mubr.f32.gmra.mrb[0].mxu0 %v705
        %v707 = vpop.f32.mrb[0].mxu0
        %v708 = vadd.f32 %v419, %v707
        %v709 = vpop.f32.mrb[0].mxu0
        %v710 = vadd.f32 %v421, %v709
        %711 = vmatprep.mubr.f32.mxu0 0.0
        %v712 = vand.u32 %v249, 4294901760
        %713 = vmatmul.mubr.f32.gmra.mrb[0].mxu0 %v712
        %v714 = vpop.f32.mrb[0].mxu0
        %v715 = vadd.f32 %v430, %v714
        %v716 = vpop.f32.mrb[0].mxu0
        %v717 = vadd.f32 %v432, %v716
        %718 = vmatprep.mubr.f32.mxu0 0.0
        %v719 = vand.u32 %v250, 4294901760
        %720 = vmatmul.mubr.f32.gmra.mrb[0].mxu0 %v719
        %v721 = vpop.f32.mrb[0].mxu0
        %v722 = vadd.f32 %v441, %v721
        %v723 = vpop.f32.mrb[0].mxu0
        %v724 = vadd.f32 %v443, %v723
        %725 = vdwg.mxu0
        %726 = vmatprep.subr.mxu0 0.0
        %v727 = vand.u32 %v211, 4294901760
        %v728 = vsub.f32 %v211, %v727
        %729 = vmatpush1.xpose.msra.mxu0 %v728
        %730 = vmatprep.subr.mxu0 0.0
        %v731 = vand.u32 %v212, 4294901760
        %v732 = vsub.f32 %v212, %v731
        %733 = vmatpush1.xpose.msra.mxu0 %v732
        %734 = vmatprep.subr.mxu0 0.0
        %v735 = vand.u32 %v213, 4294901760
        %v736 = vsub.f32 %v213, %v735
        %737 = vmatpush1.xpose.msra.mxu0 %v736
        %738 = vmatprep.subr.mxu0 0.0
        %v739 = vand.u32 %v214, 4294901760
        %v740 = vsub.f32 %v214, %v739
        %741 = vmatpush1.xpose.msra.mxu0 %v740
        %742 = vmatprep.subr.mxu0 0.0
        %v743 = vand.u32 %v215, 4294901760
        %v744 = vsub.f32 %v215, %v743
        %745 = vmatpush1.xpose.msra.mxu0 %v744
        %746 = vmatprep.subr.mxu0 0.0
        %v747 = vand.u32 %v216, 4294901760
        %v748 = vsub.f32 %v216, %v747
        %749 = vmatpush1.xpose.msra.mxu0 %v748
        %750 = vmatprep.subr.mxu0 0.0
        %v751 = vand.u32 %v217, 4294901760
        %v752 = vsub.f32 %v217, %v751
        %753 = vmatpush1.xpose.msra.mxu0 %v752
        %754 = vmatprep.subr.mxu0 0.0
        %v755 = vand.u32 %v218, 4294901760
        %v756 = vsub.f32 %v218, %v755
        %757 = vmatpush1.xpose.msra.mxu0 %v756
        %758 = vmatprep.subr.mxu0 0.0
        %v759 = vand.u32 %v219, 4294901760
        %v760 = vsub.f32 %v219, %v759
        %761 = vmatpush1.xpose.msra.mxu0 %v760
        %762 = vmatprep.subr.mxu0 0.0
        %v763 = vand.u32 %v220, 4294901760
        %v764 = vsub.f32 %v220, %v763
        %765 = vmatpush1.xpose.msra.mxu0 %v764
        %766 = vmatprep.subr.mxu0 0.0
        %v767 = vand.u32 %v221, 4294901760
        %v768 = vsub.f32 %v221, %v767
        %769 = vmatpush1.xpose.msra.mxu0 %v768
        %770 = vmatprep.subr.mxu0 0.0
        %v771 = vand.u32 %v222, 4294901760
        %v772 = vsub.f32 %v222, %v771
        %773 = vmatpush1.xpose.msra.mxu0 %v772
        %774 = vmatprep.subr.mxu0 0.0
        %v775 = vand.u32 %v223, 4294901760
        %v776 = vsub.f32 %v223, %v775
        %777 = vmatpush1.xpose.msra.mxu0 %v776
        %778 = vmatprep.subr.mxu0 0.0
        %v779 = vand.u32 %v224, 4294901760
        %v780 = vsub.f32 %v224, %v779
        %781 = vmatpush1.xpose.msra.mxu0 %v780
        %782 = vmatprep.subr.mxu0 0.0
        %v783 = vand.u32 %v225, 4294901760
        %v784 = vsub.f32 %v225, %v783
        %785 = vmatpush1.xpose.msra.mxu0 %v784
        %786 = vmatprep.subr.mxu0 0.0
        %v787 = vand.u32 %v226, 4294901760
        %v788 = vsub.f32 %v226, %v787
        %789 = vmatpush1.xpose.msra.mxu0 %v788
        %790 = vmatprep.subr.mxu0 0.0
        %v791 = vand.u32 %v227, 4294901760
        %v792 = vsub.f32 %v227, %v791
        %793 = vmatpush1.xpose.msra.mxu0 %v792
        %794 = vmatprep.subr.mxu0 0.0
        %v795 = vand.u32 %v228, 4294901760
        %v796 = vsub.f32 %v228, %v795
        %797 = vmatpush1.xpose.msra.mxu0 %v796
        %798 = vmatprep.subr.mxu0 0.0
        %v799 = vand.u32 %v229, 4294901760
        %v800 = vsub.f32 %v229, %v799
        %801 = vmatpush1.xpose.msra.mxu0 %v800
        %802 = vmatprep.subr.mxu0 0.0
        %v803 = vand.u32 %v230, 4294901760
        %v804 = vsub.f32 %v230, %v803
        %805 = vmatpush1.xpose.msra.mxu0 %v804
        %806 = vmatprep.subr.mxu0 0.0
        %v807 = vand.u32 %v231, 4294901760
        %v808 = vsub.f32 %v231, %v807
        %809 = vmatpush1.xpose.msra.mxu0 %v808
        %810 = vmatprep.subr.mxu0 0.0
        %v811 = vand.u32 %v232, 4294901760
        %v812 = vsub.f32 %v232, %v811
        %813 = vmatpush1.xpose.msra.mxu0 %v812
        %814 = vmatprep.subr.mxu0 0.0
        %v815 = vand.u32 %v233, 4294901760
        %v816 = vsub.f32 %v233, %v815
        %817 = vmatpush1.xpose.msra.mxu0 %v816
        %818 = vmatprep.subr.mxu0 0.0
        %v819 = vand.u32 %v234, 4294901760
        %v820 = vsub.f32 %v234, %v819
        %821 = vmatpush1.xpose.msra.mxu0 %v820
        %822 = vmatprep.subr.mxu0 0.0
        %v823 = vand.u32 %v235, 4294901760
        %v824 = vsub.f32 %v235, %v823
        %825 = vmatpush1.xpose.msra.mxu0 %v824
        %826 = vmatprep.subr.mxu0 0.0
        %v827 = vand.u32 %v236, 4294901760
        %v828 = vsub.f32 %v236, %v827
        %829 = vmatpush1.xpose.msra.mxu0 %v828
        %830 = vmatprep.subr.mxu0 0.0
        %v831 = vand.u32 %v237, 4294901760
        %v832 = vsub.f32 %v237, %v831
        %833 = vmatpush1.xpose.msra.mxu0 %v832
        %834 = vmatprep.subr.mxu0 0.0
        %v835 = vand.u32 %v238, 4294901760
        %v836 = vsub.f32 %v238, %v835
        %837 = vmatpush1.xpose.msra.mxu0 %v836
        %838 = vmatprep.subr.mxu0 0.0
        %v839 = vand.u32 %v239, 4294901760
        %v840 = vsub.f32 %v239, %v839
        %841 = vmatpush1.xpose.msra.mxu0 %v840
        %842 = vmatprep.subr.mxu0 0.0
        %v843 = vand.u32 %v240, 4294901760
        %v844 = vsub.f32 %v240, %v843
        %845 = vmatpush1.xpose.msra.mxu0 %v844
        %846 = vmatprep.subr.mxu0 0.0
        %v847 = vand.u32 %v241, 4294901760
        %v848 = vsub.f32 %v241, %v847
        %849 = vmatpush1.xpose.msra.mxu0 %v848
        %850 = vmatprep.subr.mxu0 0.0
        %v851 = vand.u32 %v242, 4294901760
        %v852 = vsub.f32 %v242, %v851
        %853 = vmatpush1.xpose.msra.mxu0 %v852
        %854 = vmatprep.mubr.f32.mxu0 0.0
        %v855 = vand.u32 %v243, 4294901760
        %v856 = vsub.f32 %v243, %v855
        %857 = vmatmul.mubr.f32.gmra.mrb[0].mxu0 %v856
        %v858 = vpop.f32.mrb[0].mxu0
        %v859 = vadd.f32 %v673, %v858
        %v860 = vpop.f32.mrb[0].mxu0
        %v861 = vadd.f32 %v675, %v860
        %862 = vmatprep.mubr.f32.mxu0 0.0
        %v863 = vand.u32 %v244, 4294901760
        %v864 = vsub.f32 %v244, %v863
        %865 = vmatmul.mubr.f32.gmra.mrb[0].mxu0 %v864
        %v866 = vpop.f32.mrb[0].mxu0
        %v867 = vadd.f32 %v680, %v866
        %v868 = vpop.f32.mrb[0].mxu0
        %v869 = vadd.f32 %v682, %v868
        %870 = vmatprep.mubr.f32.mxu0 0.0
        %v871 = vand.u32 %v245, 4294901760
        %v872 = vsub.f32 %v245, %v871
        %873 = vmatmul.mubr.f32.gmra.mrb[0].mxu0 %v872
        %v874 = vpop.f32.mrb[0].mxu0
        %v875 = vadd.f32 %v687, %v874
        %v876 = vpop.f32.mrb[0].mxu0
        %v877 = vadd.f32 %v689, %v876
        %878 = vmatprep.mubr.f32.mxu0 0.0
        %v879 = vand.u32 %v246, 4294901760
        %v880 = vsub.f32 %v246, %v879
        %881 = vmatmul.mubr.f32.gmra.mrb[0].mxu0 %v880
        %v882 = vpop.f32.mrb[0].mxu0
        %v883 = vadd.f32 %v694, %v882
        %v884 = vpop.f32.mrb[0].mxu0
        %v885 = vadd.f32 %v696, %v884
        %886 = vmatprep.mubr.f32.mxu0 0.0
        %v887 = vand.u32 %v247, 4294901760
        %v888 = vsub.f32 %v247, %v887
        %889 = vmatmul.mubr.f32.gmra.mrb[0].mxu0 %v888
        %v890 = vpop.f32.mrb[0].mxu0
        %v891 = vadd.f32 %v701, %v890
        %v892 = vpop.f32.mrb[0].mxu0
        %v893 = vadd.f32 %v703, %v892
        %894 = vmatprep.mubr.f32.mxu0 0.0
        %v895 = vand.u32 %v248, 4294901760
        %v896 = vsub.f32 %v248, %v895
        %897 = vmatmul.mubr.f32.gmra.mrb[0].mxu0 %v896
        %v898 = vpop.f32.mrb[0].mxu0
        %v899 = vadd.f32 %v708, %v898
        %v900 = vpop.f32.mrb[0].mxu0
        %v901 = vadd.f32 %v710, %v900
        %902 = vmatprep.mubr.f32.mxu0 0.0
        %v903 = vand.u32 %v249, 4294901760
        %v904 = vsub.f32 %v249, %v903
        %905 = vmatmul.mubr.f32.gmra.mrb[0].mxu0 %v904
        %v906 = vpop.f32.mrb[0].mxu0
        %v907 = vadd.f32 %v715, %v906
        %v908 = vpop.f32.mrb[0].mxu0
        %v909 = vadd.f32 %v717, %v908
        %910 = vmatprep.mubr.f32.mxu0 0.0
        %v911 = vand.u32 %v250, 4294901760
        %v912 = vsub.f32 %v250, %v911
        %913 = vmatmul.mubr.f32.gmra.mrb[0].mxu0 %v912
        %v914 = vpop.f32.mrb[0].mxu0
        %v915 = vadd.f32 %v722, %v914
        %v916 = vpop.f32.mrb[0].mxu0
        %v917 = vadd.f32 %v724, %v916
        %918 = vdwg.mxu0
        %919 = vmatprep.subr.mxu0 0.0
        %v920 = vand.u32 %v211, 4294901760
        %921 = vmatpush1.xpose.msra.mxu0 %v920
        %922 = vmatprep.subr.mxu0 0.0
        %v923 = vand.u32 %v212, 4294901760
        %924 = vmatpush1.xpose.msra.mxu0 %v923
        %925 = vmatprep.subr.mxu0 0.0
        %v926 = vand.u32 %v213, 4294901760
        %927 = vmatpush1.xpose.msra.mxu0 %v926
        %928 = vmatprep.subr.mxu0 0.0
        %v929 = vand.u32 %v214, 4294901760
        %930 = vmatpush1.xpose.msra.mxu0 %v929
        %931 = vmatprep.subr.mxu0 0.0
        %v932 = vand.u32 %v215, 4294901760
        %933 = vmatpush1.xpose.msra.mxu0 %v932
        %934 = vmatprep.subr.mxu0 0.0
        %v935 = vand.u32 %v216, 4294901760
        %936 = vmatpush1.xpose.msra.mxu0 %v935
        %937 = vmatprep.subr.mxu0 0.0
        %v938 = vand.u32 %v217, 4294901760
        %939 = vmatpush1.xpose.msra.mxu0 %v938
        %940 = vmatprep.subr.mxu0 0.0
        %v941 = vand.u32 %v218, 4294901760
        %942 = vmatpush1.xpose.msra.mxu0 %v941
        %943 = vmatprep.subr.mxu0 0.0
        %v944 = vand.u32 %v219, 4294901760
        %945 = vmatpush1.xpose.msra.mxu0 %v944
        %946 = vmatprep.subr.mxu0 0.0
        %v947 = vand.u32 %v220, 4294901760
        %948 = vmatpush1.xpose.msra.mxu0 %v947
        %949 = vmatprep.subr.mxu0 0.0
        %v950 = vand.u32 %v221, 4294901760
        %951 = vmatpush1.xpose.msra.mxu0 %v950
        %952 = vmatprep.subr.mxu0 0.0
        %v953 = vand.u32 %v222, 4294901760
        %954 = vmatpush1.xpose.msra.mxu0 %v953
        %955 = vmatprep.subr.mxu0 0.0
        %v956 = vand.u32 %v223, 4294901760
        %957 = vmatpush1.xpose.msra.mxu0 %v956
        %958 = vmatprep.subr.mxu0 0.0
        %v959 = vand.u32 %v224, 4294901760
        %960 = vmatpush1.xpose.msra.mxu0 %v959
        %961 = vmatprep.subr.mxu0 0.0
        %v962 = vand.u32 %v225, 4294901760
        %963 = vmatpush1.xpose.msra.mxu0 %v962
        %964 = vmatprep.subr.mxu0 0.0
        %v965 = vand.u32 %v226, 4294901760
        %966 = vmatpush1.xpose.msra.mxu0 %v965
        %967 = vmatprep.subr.mxu0 0.0
        %v968 = vand.u32 %v227, 4294901760
        %969 = vmatpush1.xpose.msra.mxu0 %v968
        %970 = vmatprep.subr.mxu0 0.0
        %v971 = vand.u32 %v228, 4294901760
        %972 = vmatpush1.xpose.msra.mxu0 %v971
        %973 = vmatprep.subr.mxu0 0.0
        %v974 = vand.u32 %v229, 4294901760
        %975 = vmatpush1.xpose.msra.mxu0 %v974
        %976 = vmatprep.subr.mxu0 0.0
        %v977 = vand.u32 %v230, 4294901760
        %978 = vmatpush1.xpose.msra.mxu0 %v977
        %979 = vmatprep.subr.mxu0 0.0
        %v980 = vand.u32 %v231, 4294901760
        %981 = vmatpush1.xpose.msra.mxu0 %v980
        %982 = vmatprep.subr.mxu0 0.0
        %v983 = vand.u32 %v232, 4294901760
        %984 = vmatpush1.xpose.msra.mxu0 %v983
        %985 = vmatprep.subr.mxu0 0.0
        %v986 = vand.u32 %v233, 4294901760
        %987 = vmatpush1.xpose.msra.mxu0 %v986
        %988 = vmatprep.subr.mxu0 0.0
        %v989 = vand.u32 %v234, 4294901760
        %990 = vmatpush1.xpose.msra.mxu0 %v989
        %991 = vmatprep.subr.mxu0 0.0
        %v992 = vand.u32 %v235, 4294901760
        %993 = vmatpush1.xpose.msra.mxu0 %v992
        %994 = vmatprep.subr.mxu0 0.0
        %v995 = vand.u32 %v236, 4294901760
        %996 = vmatpush1.xpose.msra.mxu0 %v995
        %997 = vmatprep.subr.mxu0 0.0
        %v998 = vand.u32 %v237, 4294901760
        %999 = vmatpush1.xpose.msra.mxu0 %v998
        %1000 = vmatprep.subr.mxu0 0.0
        %v1001 = vand.u32 %v238, 4294901760
        %1002 = vmatpush1.xpose.msra.mxu0 %v1001
        %1003 = vmatprep.subr.mxu0 0.0
        %v1004 = vand.u32 %v239, 4294901760
        %1005 = vmatpush1.xpose.msra.mxu0 %v1004
        %1006 = vmatprep.subr.mxu0 0.0
        %v1007 = vand.u32 %v240, 4294901760
        %1008 = vmatpush1.xpose.msra.mxu0 %v1007
        %1009 = vmatprep.subr.mxu0 0.0
        %v1010 = vand.u32 %v241, 4294901760
        %1011 = vmatpush1.xpose.msra.mxu0 %v1010
        %1012 = vmatprep.subr.mxu0 0.0
        %v1013 = vand.u32 %v242, 4294901760
        %1014 = vmatpush1.xpose.msra.mxu0 %v1013
        %1015 = vmatprep.mubr.f32.mxu0 0.0
        %v1016 = vand.u32 %v243, 4294901760
        %v1017 = vsub.f32 %v243, %v1016
        %v1018 = vand.u32 %v1017, 4294901760
        %1019 = vmatmul.mubr.f32.gmra.mrb[0].mxu0 %v1018
        %v1020 = vpop.f32.mrb[0].mxu0
        %v1021 = vadd.f32 %v859, %v1020
        %v1022 = vpop.f32.mrb[0].mxu0
        %v1023 = vadd.f32 %v861, %v1022
        %1024 = vmatprep.mubr.f32.mxu0 0.0
        %v1025 = vand.u32 %v244, 4294901760
        %v1026 = vsub.f32 %v244, %v1025
        %v1027 = vand.u32 %v1026, 4294901760
        %1028 = vmatmul.mubr.f32.gmra.mrb[0].mxu0 %v1027
        %v1029 = vpop.f32.mrb[0].mxu0
        %v1030 = vadd.f32 %v867, %v1029
        %v1031 = vpop.f32.mrb[0].mxu0
        %v1032 = vadd.f32 %v869, %v1031
        %1033 = vmatprep.mubr.f32.mxu0 0.0
        %v1034 = vand.u32 %v245, 4294901760
        %v1035 = vsub.f32 %v245, %v1034
        %v1036 = vand.u32 %v1035, 4294901760
        %1037 = vmatmul.mubr.f32.gmra.mrb[0].mxu0 %v1036
        %v1038 = vpop.f32.mrb[0].mxu0
        %v1039 = vadd.f32 %v875, %v1038
        %v1040 = vpop.f32.mrb[0].mxu0
        %v1041 = vadd.f32 %v877, %v1040
        %1042 = vmatprep.mubr.f32.mxu0 0.0
        %v1043 = vand.u32 %v246, 4294901760
        %v1044 = vsub.f32 %v246, %v1043
        %v1045 = vand.u32 %v1044, 4294901760
        %1046 = vmatmul.mubr.f32.gmra.mrb[0].mxu0 %v1045
        %v1047 = vpop.f32.mrb[0].mxu0
        %v1048 = vadd.f32 %v883, %v1047
        %v1049 = vpop.f32.mrb[0].mxu0
        %v1050 = vadd.f32 %v885, %v1049
        %1051 = vmatprep.mubr.f32.mxu0 0.0
        %v1052 = vand.u32 %v247, 4294901760
        %v1053 = vsub.f32 %v247, %v1052
        %v1054 = vand.u32 %v1053, 4294901760
        %1055 = vmatmul.mubr.f32.gmra.mrb[0].mxu0 %v1054
        %v1056 = vpop.f32.mrb[0].mxu0
        %v1057 = vadd.f32 %v891, %v1056
        %v1058 = vpop.f32.mrb[0].mxu0
        %v1059 = vadd.f32 %v893, %v1058
        %1060 = vmatprep.mubr.f32.mxu0 0.0
        %v1061 = vand.u32 %v248, 4294901760
        %v1062 = vsub.f32 %v248, %v1061
        %v1063 = vand.u32 %v1062, 4294901760
        %1064 = vmatmul.mubr.f32.gmra.mrb[0].mxu0 %v1063
        %v1065 = vpop.f32.mrb[0].mxu0
        %v1066 = vadd.f32 %v899, %v1065
        %v1067 = vpop.f32.mrb[0].mxu0
        %v1068 = vadd.f32 %v901, %v1067
        %1069 = vmatprep.mubr.f32.mxu0 0.0
        %v1070 = vand.u32 %v249, 4294901760
        %v1071 = vsub.f32 %v249, %v1070
        %v1072 = vand.u32 %v1071, 4294901760
        %1073 = vmatmul.mubr.f32.gmra.mrb[0].mxu0 %v1072
        %v1074 = vpop.f32.mrb[0].mxu0
        %v1075 = vadd.f32 %v907, %v1074
        %v1076 = vpop.f32.mrb[0].mxu0
        %v1077 = vadd.f32 %v909, %v1076
        %1078 = vmatprep.mubr.f32.mxu0 0.0
        %v1079 = vand.u32 %v250, 4294901760
        %v1080 = vsub.f32 %v250, %v1079
        %v1081 = vand.u32 %v1080, 4294901760
        %1082 = vmatmul.mubr.f32.gmra.mrb[0].mxu0 %v1081
        %v1083 = vpop.f32.mrb[0].mxu0
        %v1084 = vadd.f32 %v915, %v1083
        %v1085 = vpop.f32.mrb[0].mxu0
        %v1086 = vadd.f32 %v917, %v1085
        %1087 = vdwg.mxu0
        %1088 = vmatprep.subr.mxu0 0.0
        %v1089 = vand.u32 %v211, 4294901760
        %v1090 = vsub.f32 %v211, %v1089
        %v1091 = vand.u32 %v1090, 4294901760
        %1092 = vmatpush1.xpose.msra.mxu0 %v1091
        %1093 = vmatprep.subr.mxu0 0.0
        %v1094 = vand.u32 %v212, 4294901760
        %v1095 = vsub.f32 %v212, %v1094
        %v1096 = vand.u32 %v1095, 4294901760
        %1097 = vmatpush1.xpose.msra.mxu0 %v1096
        %1098 = vmatprep.subr.mxu0 0.0
        %v1099 = vand.u32 %v213, 4294901760
        %v1100 = vsub.f32 %v213, %v1099
        %v1101 = vand.u32 %v1100, 4294901760
        %1102 = vmatpush1.xpose.msra.mxu0 %v1101
        %1103 = vmatprep.subr.mxu0 0.0
        %v1104 = vand.u32 %v214, 4294901760
        %v1105 = vsub.f32 %v214, %v1104
        %v1106 = vand.u32 %v1105, 4294901760
        %1107 = vmatpush1.xpose.msra.mxu0 %v1106
        %1108 = vmatprep.subr.mxu0 0.0
        %v1109 = vand.u32 %v215, 4294901760
        %v1110 = vsub.f32 %v215, %v1109
        %v1111 = vand.u32 %v1110, 4294901760
        %1112 = vmatpush1.xpose.msra.mxu0 %v1111
        %1113 = vmatprep.subr.mxu0 0.0
        %v1114 = vand.u32 %v216, 4294901760
        %v1115 = vsub.f32 %v216, %v1114
        %v1116 = vand.u32 %v1115, 4294901760
        %1117 = vmatpush1.xpose.msra.mxu0 %v1116
        %1118 = vmatprep.subr.mxu0 0.0
        %v1119 = vand.u32 %v217, 4294901760
        %v1120 = vsub.f32 %v217, %v1119
        %v1121 = vand.u32 %v1120, 4294901760
        %1122 = vmatpush1.xpose.msra.mxu0 %v1121
        %1123 = vmatprep.subr.mxu0 0.0
        %v1124 = vand.u32 %v218, 4294901760
        %v1125 = vsub.f32 %v218, %v1124
        %v1126 = vand.u32 %v1125, 4294901760
        %1127 = vmatpush1.xpose.msra.mxu0 %v1126
        %1128 = vmatprep.subr.mxu0 0.0
        %v1129 = vand.u32 %v219, 4294901760
        %v1130 = vsub.f32 %v219, %v1129
        %v1131 = vand.u32 %v1130, 4294901760
        %1132 = vmatpush1.xpose.msra.mxu0 %v1131
        %1133 = vmatprep.subr.mxu0 0.0
        %v1134 = vand.u32 %v220, 4294901760
        %v1135 = vsub.f32 %v220, %v1134
        %v1136 = vand.u32 %v1135, 4294901760
        %1137 = vmatpush1.xpose.msra.mxu0 %v1136
        %1138 = vmatprep.subr.mxu0 0.0
        %v1139 = vand.u32 %v221, 4294901760
        %v1140 = vsub.f32 %v221, %v1139
        %v1141 = vand.u32 %v1140, 4294901760
        %1142 = vmatpush1.xpose.msra.mxu0 %v1141
        %1143 = vmatprep.subr.mxu0 0.0
        %v1144 = vand.u32 %v222, 4294901760
        %v1145 = vsub.f32 %v222, %v1144
        %v1146 = vand.u32 %v1145, 4294901760
        %1147 = vmatpush1.xpose.msra.mxu0 %v1146
        %1148 = vmatprep.subr.mxu0 0.0
        %v1149 = vand.u32 %v223, 4294901760
        %v1150 = vsub.f32 %v223, %v1149
        %v1151 = vand.u32 %v1150, 4294901760
        %1152 = vmatpush1.xpose.msra.mxu0 %v1151
        %1153 = vmatprep.subr.mxu0 0.0
        %v1154 = vand.u32 %v224, 4294901760
        %v1155 = vsub.f32 %v224, %v1154
        %v1156 = vand.u32 %v1155, 4294901760
        %1157 = vmatpush1.xpose.msra.mxu0 %v1156
        %1158 = vmatprep.subr.mxu0 0.0
        %v1159 = vand.u32 %v225, 4294901760
        %v1160 = vsub.f32 %v225, %v1159
        %v1161 = vand.u32 %v1160, 4294901760
        %1162 = vmatpush1.xpose.msra.mxu0 %v1161
        %1163 = vmatprep.subr.mxu0 0.0
        %v1164 = vand.u32 %v226, 4294901760
        %v1165 = vsub.f32 %v226, %v1164
        %v1166 = vand.u32 %v1165, 4294901760
        %1167 = vmatpush1.xpose.msra.mxu0 %v1166
        %1168 = vmatprep.subr.mxu0 0.0
        %v1169 = vand.u32 %v227, 4294901760
        %v1170 = vsub.f32 %v227, %v1169
        %v1171 = vand.u32 %v1170, 4294901760
        %1172 = vmatpush1.xpose.msra.mxu0 %v1171
        %1173 = vmatprep.subr.mxu0 0.0
        %v1174 = vand.u32 %v228, 4294901760
        %v1175 = vsub.f32 %v228, %v1174
        %v1176 = vand.u32 %v1175, 4294901760
        %1177 = vmatpush1.xpose.msra.mxu0 %v1176
        %1178 = vmatprep.subr.mxu0 0.0
        %v1179 = vand.u32 %v229, 4294901760
        %v1180 = vsub.f32 %v229, %v1179
        %v1181 = vand.u32 %v1180, 4294901760
        %1182 = vmatpush1.xpose.msra.mxu0 %v1181
        %1183 = vmatprep.subr.mxu0 0.0
        %v1184 = vand.u32 %v230, 4294901760
        %v1185 = vsub.f32 %v230, %v1184
        %v1186 = vand.u32 %v1185, 4294901760
        %1187 = vmatpush1.xpose.msra.mxu0 %v1186
        %1188 = vmatprep.subr.mxu0 0.0
        %v1189 = vand.u32 %v231, 4294901760
        %v1190 = vsub.f32 %v231, %v1189
        %v1191 = vand.u32 %v1190, 4294901760
        %1192 = vmatpush1.xpose.msra.mxu0 %v1191
        %1193 = vmatprep.subr.mxu0 0.0
        %v1194 = vand.u32 %v232, 4294901760
        %v1195 = vsub.f32 %v232, %v1194
        %v1196 = vand.u32 %v1195, 4294901760
        %1197 = vmatpush1.xpose.msra.mxu0 %v1196
        %1198 = vmatprep.subr.mxu0 0.0
        %v1199 = vand.u32 %v233, 4294901760
        %v1200 = vsub.f32 %v233, %v1199
        %v1201 = vand.u32 %v1200, 4294901760
        %1202 = vmatpush1.xpose.msra.mxu0 %v1201
        %1203 = vmatprep.subr.mxu0 0.0
        %v1204 = vand.u32 %v234, 4294901760
        %v1205 = vsub.f32 %v234, %v1204
        %v1206 = vand.u32 %v1205, 4294901760
        %1207 = vmatpush1.xpose.msra.mxu0 %v1206
        %1208 = vmatprep.subr.mxu0 0.0
        %v1209 = vand.u32 %v235, 4294901760
        %v1210 = vsub.f32 %v235, %v1209
        %v1211 = vand.u32 %v1210, 4294901760
        %1212 = vmatpush1.xpose.msra.mxu0 %v1211
        %1213 = vmatprep.subr.mxu0 0.0
        %v1214 = vand.u32 %v236, 4294901760
        %v1215 = vsub.f32 %v236, %v1214
        %v1216 = vand.u32 %v1215, 4294901760
        %1217 = vmatpush1.xpose.msra.mxu0 %v1216
        %1218 = vmatprep.subr.mxu0 0.0
        %v1219 = vand.u32 %v237, 4294901760
        %v1220 = vsub.f32 %v237, %v1219
        %v1221 = vand.u32 %v1220, 4294901760
        %1222 = vmatpush1.xpose.msra.mxu0 %v1221
        %1223 = vmatprep.subr.mxu0 0.0
        %v1224 = vand.u32 %v238, 4294901760
        %v1225 = vsub.f32 %v238, %v1224
        %v1226 = vand.u32 %v1225, 4294901760
        %1227 = vmatpush1.xpose.msra.mxu0 %v1226
        %1228 = vmatprep.subr.mxu0 0.0
        %v1229 = vand.u32 %v239, 4294901760
        %v1230 = vsub.f32 %v239, %v1229
        %v1231 = vand.u32 %v1230, 4294901760
        %1232 = vmatpush1.xpose.msra.mxu0 %v1231
        %1233 = vmatprep.subr.mxu0 0.0
        %v1234 = vand.u32 %v240, 4294901760
        %v1235 = vsub.f32 %v240, %v1234
        %v1236 = vand.u32 %v1235, 4294901760
        %1237 = vmatpush1.xpose.msra.mxu0 %v1236
        %1238 = vmatprep.subr.mxu0 0.0
        %v1239 = vand.u32 %v241, 4294901760
        %v1240 = vsub.f32 %v241, %v1239
        %v1241 = vand.u32 %v1240, 4294901760
        %1242 = vmatpush1.xpose.msra.mxu0 %v1241
        %1243 = vmatprep.subr.mxu0 0.0
        %v1244 = vand.u32 %v242, 4294901760
        %v1245 = vsub.f32 %v242, %v1244
        %v1246 = vand.u32 %v1245, 4294901760
        %1247 = vmatpush1.xpose.msra.mxu0 %v1246
        %1248 = vmatprep.mubr.f32.mxu0 0.0
        %v1249 = vand.u32 %v243, 4294901760
        %1250 = vmatmul.mubr.f32.gmra.mrb[0].mxu0 %v1249
        %v1251 = vpop.f32.mrb[0].mxu0
        %v1252 = vadd.f32 %v1021, %v1251
        %v1253 = vpop.f32.mrb[0].mxu0
        %v1254 = vadd.f32 %v1023, %v1253
        %1255 = vmatprep.mubr.f32.mxu0 0.0
        %v1256 = vand.u32 %v244, 4294901760
        %1257 = vmatmul.mubr.f32.gmra.mrb[0].mxu0 %v1256
        %v1258 = vpop.f32.mrb[0].mxu0
        %v1259 = vadd.f32 %v1030, %v1258
        %v1260 = vpop.f32.mrb[0].mxu0
        %v1261 = vadd.f32 %v1032, %v1260
        %1262 = vmatprep.mubr.f32.mxu0 0.0
        %v1263 = vand.u32 %v245, 4294901760
        %1264 = vmatmul.mubr.f32.gmra.mrb[0].mxu0 %v1263
        %v1265 = vpop.f32.mrb[0].mxu0
        %v1266 = vadd.f32 %v1039, %v1265
        %v1267 = vpop.f32.mrb[0].mxu0
        %v1268 = vadd.f32 %v1041, %v1267
        %1269 = vmatprep.mubr.f32.mxu0 0.0
        %v1270 = vand.u32 %v246, 4294901760
        %1271 = vmatmul.mubr.f32.gmra.mrb[0].mxu0 %v1270
        %v1272 = vpop.f32.mrb[0].mxu0
        %v1273 = vadd.f32 %v1048, %v1272
        %v1274 = vpop.f32.mrb[0].mxu0
        %v1275 = vadd.f32 %v1050, %v1274
        %1276 = vmatprep.mubr.f32.mxu0 0.0
        %v1277 = vand.u32 %v247, 4294901760
        %1278 = vmatmul.mubr.f32.gmra.mrb[0].mxu0 %v1277
        %v1279 = vpop.f32.mrb[0].mxu0
        %v1280 = vadd.f32 %v1057, %v1279
        %v1281 = vpop.f32.mrb[0].mxu0
        %v1282 = vadd.f32 %v1059, %v1281
        %1283 = vmatprep.mubr.f32.mxu0 0.0
        %v1284 = vand.u32 %v248, 4294901760
        %1285 = vmatmul.mubr.f32.gmra.mrb[0].mxu0 %v1284
        %v1286 = vpop.f32.mrb[0].mxu0
        %v1287 = vadd.f32 %v1066, %v1286
        %v1288 = vpop.f32.mrb[0].mxu0
        %v1289 = vadd.f32 %v1068, %v1288
        %1290 = vmatprep.mubr.f32.mxu0 0.0
        %v1291 = vand.u32 %v249, 4294901760
        %1292 = vmatmul.mubr.f32.gmra.mrb[0].mxu0 %v1291
        %v1293 = vpop.f32.mrb[0].mxu0
        %v1294 = vadd.f32 %v1075, %v1293
        %v1295 = vpop.f32.mrb[0].mxu0
        %v1296 = vadd.f32 %v1077, %v1295
        %1297 = vmatprep.mubr.f32.mxu0 0.0
        %v1298 = vand.u32 %v250, 4294901760
        %1299 = vmatmul.mubr.f32.gmra.mrb[0].mxu0 %v1298
        %v1300 = vpop.f32.mrb[0].mxu0
        %v1301 = vadd.f32 %v1084, %v1300
        %v1302 = vpop.f32.mrb[0].mxu0
        %v1303 = vadd.f32 %v1086, %v1302
        %1304 = vdwg.mxu0
        %1305 = vmatprep.subr.mxu0 0.0
        %v1306 = vand.u32 %v211, 4294901760
        %1307 = vmatpush1.xpose.msra.mxu0 %v1306
        %1308 = vmatprep.subr.mxu0 0.0
        %v1309 = vand.u32 %v212, 4294901760
        %1310 = vmatpush1.xpose.msra.mxu0 %v1309
        %1311 = vmatprep.subr.mxu0 0.0
        %v1312 = vand.u32 %v213, 4294901760
        %1313 = vmatpush1.xpose.msra.mxu0 %v1312
        %1314 = vmatprep.subr.mxu0 0.0
        %v1315 = vand.u32 %v214, 4294901760
        %1316 = vmatpush1.xpose.msra.mxu0 %v1315
        %1317 = vmatprep.subr.mxu0 0.0
        %v1318 = vand.u32 %v215, 4294901760
        %1319 = vmatpush1.xpose.msra.mxu0 %v1318
        %1320 = vmatprep.subr.mxu0 0.0
        %v1321 = vand.u32 %v216, 4294901760
        %1322 = vmatpush1.xpose.msra.mxu0 %v1321
        %1323 = vmatprep.subr.mxu0 0.0
        %v1324 = vand.u32 %v217, 4294901760
        %1325 = vmatpush1.xpose.msra.mxu0 %v1324
        %1326 = vmatprep.subr.mxu0 0.0
        %v1327 = vand.u32 %v218, 4294901760
        %1328 = vmatpush1.xpose.msra.mxu0 %v1327
        %1329 = vmatprep.subr.mxu0 0.0
        %v1330 = vand.u32 %v219, 4294901760
        %1331 = vmatpush1.xpose.msra.mxu0 %v1330
        %1332 = vmatprep.subr.mxu0 0.0
        %v1333 = vand.u32 %v220, 4294901760
        %1334 = vmatpush1.xpose.msra.mxu0 %v1333
        %1335 = vmatprep.subr.mxu0 0.0
        %v1336 = vand.u32 %v221, 4294901760
        %1337 = vmatpush1.xpose.msra.mxu0 %v1336
        %1338 = vmatprep.subr.mxu0 0.0
        %v1339 = vand.u32 %v222, 4294901760
        %1340 = vmatpush1.xpose.msra.mxu0 %v1339
        %1341 = vmatprep.subr.mxu0 0.0
        %v1342 = vand.u32 %v223, 4294901760
        %1343 = vmatpush1.xpose.msra.mxu0 %v1342
        %1344 = vmatprep.subr.mxu0 0.0
        %v1345 = vand.u32 %v224, 4294901760
        %1346 = vmatpush1.xpose.msra.mxu0 %v1345
        %1347 = vmatprep.subr.mxu0 0.0
        %v1348 = vand.u32 %v225, 4294901760
        %1349 = vmatpush1.xpose.msra.mxu0 %v1348
        %1350 = vmatprep.subr.mxu0 0.0
        %v1351 = vand.u32 %v226, 4294901760
        %1352 = vmatpush1.xpose.msra.mxu0 %v1351
        %1353 = vmatprep.subr.mxu0 0.0
        %v1354 = vand.u32 %v227, 4294901760
        %1355 = vmatpush1.xpose.msra.mxu0 %v1354
        %1356 = vmatprep.subr.mxu0 0.0
        %v1357 = vand.u32 %v228, 4294901760
        %1358 = vmatpush1.xpose.msra.mxu0 %v1357
        %1359 = vmatprep.subr.mxu0 0.0
        %v1360 = vand.u32 %v229, 4294901760
        %1361 = vmatpush1.xpose.msra.mxu0 %v1360
        %1362 = vmatprep.subr.mxu0 0.0
        %v1363 = vand.u32 %v230, 4294901760
        %1364 = vmatpush1.xpose.msra.mxu0 %v1363
        %1365 = vmatprep.subr.mxu0 0.0
        %v1366 = vand.u32 %v231, 4294901760
        %1367 = vmatpush1.xpose.msra.mxu0 %v1366
        %1368 = vmatprep.subr.mxu0 0.0
        %v1369 = vand.u32 %v232, 4294901760
        %1370 = vmatpush1.xpose.msra.mxu0 %v1369
        %1371 = vmatprep.subr.mxu0 0.0
        %v1372 = vand.u32 %v233, 4294901760
        %1373 = vmatpush1.xpose.msra.mxu0 %v1372
        %1374 = vmatprep.subr.mxu0 0.0
        %v1375 = vand.u32 %v234, 4294901760
        %1376 = vmatpush1.xpose.msra.mxu0 %v1375
        %1377 = vmatprep.subr.mxu0 0.0
        %v1378 = vand.u32 %v235, 4294901760
        %1379 = vmatpush1.xpose.msra.mxu0 %v1378
        %1380 = vmatprep.subr.mxu0 0.0
        %v1381 = vand.u32 %v236, 4294901760
        %1382 = vmatpush1.xpose.msra.mxu0 %v1381
        %1383 = vmatprep.subr.mxu0 0.0
        %v1384 = vand.u32 %v237, 4294901760
        %1385 = vmatpush1.xpose.msra.mxu0 %v1384
        %1386 = vmatprep.subr.mxu0 0.0
        %v1387 = vand.u32 %v238, 4294901760
        %1388 = vmatpush1.xpose.msra.mxu0 %v1387
        %1389 = vmatprep.subr.mxu0 0.0
        %v1390 = vand.u32 %v239, 4294901760
        %1391 = vmatpush1.xpose.msra.mxu0 %v1390
        %1392 = vmatprep.subr.mxu0 0.0
        %v1393 = vand.u32 %v240, 4294901760
        %1394 = vmatpush1.xpose.msra.mxu0 %v1393
        %1395 = vmatprep.subr.mxu0 0.0
        %v1396 = vand.u32 %v241, 4294901760
        %1397 = vmatpush1.xpose.msra.mxu0 %v1396
        %1398 = vmatprep.subr.mxu0 0.0
        %v1399 = vand.u32 %v242, 4294901760
        %1400 = vmatpush1.xpose.msra.mxu0 %v1399
        %1401 = vmatprep.mubr.f32.mxu0 0.0
        %v1402 = vand.u32 %v243, 4294901760
        %1403 = vmatmul.mubr.f32.gmra.mrb[0].mxu0 %v1402
        %v1404 = vpop.f32.mrb[0].mxu0
        %v1405 = vadd.f32 %v1252, %v1404
        %v1406 = vpop.f32.mrb[0].mxu0
        %v1407 = vadd.f32 %v1254, %v1406
        %1408 = vmatprep.mubr.f32.mxu0 0.0
        %v1409 = vand.u32 %v244, 4294901760
        %1410 = vmatmul.mubr.f32.gmra.mrb[0].mxu0 %v1409
        %v1411 = vpop.f32.mrb[0].mxu0
        %v1412 = vadd.f32 %v1259, %v1411
        %v1413 = vpop.f32.mrb[0].mxu0
        %v1414 = vadd.f32 %v1261, %v1413
        %1415 = vmatprep.mubr.f32.mxu0 0.0
        %v1416 = vand.u32 %v245, 4294901760
        %1417 = vmatmul.mubr.f32.gmra.mrb[0].mxu0 %v1416
        %v1418 = vpop.f32.mrb[0].mxu0
        %v1419 = vadd.f32 %v1266, %v1418
        %v1420 = vpop.f32.mrb[0].mxu0
        %v1421 = vadd.f32 %v1268, %v1420
        %1422 = vmatprep.mubr.f32.mxu0 0.0
        %v1423 = vand.u32 %v246, 4294901760
        %1424 = vmatmul.mubr.f32.gmra.mrb[0].mxu0 %v1423
        %v1425 = vpop.f32.mrb[0].mxu0
        %v1426 = vadd.f32 %v1273, %v1425
        %v1427 = vpop.f32.mrb[0].mxu0
        %v1428 = vadd.f32 %v1275, %v1427
        %1429 = vmatprep.mubr.f32.mxu0 0.0
        %v1430 = vand.u32 %v247, 4294901760
        %1431 = vmatmul.mubr.f32.gmra.mrb[0].mxu0 %v1430
        %v1432 = vpop.f32.mrb[0].mxu0
        %v1433 = vadd.f32 %v1280, %v1432
        %v1434 = vpop.f32.mrb[0].mxu0
        %v1435 = vadd.f32 %v1282, %v1434
        %1436 = vmatprep.mubr.f32.mxu0 0.0
        %v1437 = vand.u32 %v248, 4294901760
        %1438 = vmatmul.mubr.f32.gmra.mrb[0].mxu0 %v1437
        %v1439 = vpop.f32.mrb[0].mxu0
        %v1440 = vadd.f32 %v1287, %v1439
        %v1441 = vpop.f32.mrb[0].mxu0
        %v1442 = vadd.f32 %v1289, %v1441
        %1443 = vmatprep.mubr.f32.mxu0 0.0
        %v1444 = vand.u32 %v249, 4294901760
        %1445 = vmatmul.mubr.f32.gmra.mrb[0].mxu0 %v1444
        %v1446 = vpop.f32.mrb[0].mxu0
        %v1447 = vadd.f32 %v1294, %v1446
        %v1448 = vpop.f32.mrb[0].mxu0
        %v1449 = vadd.f32 %v1296, %v1448
        %1450 = vmatprep.mubr.f32.mxu0 0.0
        %v1451 = vand.u32 %v250, 4294901760
        %1452 = vmatmul.mubr.f32.gmra.mrb[0].mxu0 %v1451
        %v1453 = vpop.f32.mrb[0].mxu0
        %v1454 = vadd.f32 %v1301, %v1453
        %v1455 = vpop.f32.mrb[0].mxu0
        %v1456 = vadd.f32 %v1303, %v1455
        %1457 = vdwg.mxu0
        %1458 = vmatprep.subr.mxu0 0.0
        %v1459 = vand.u32 %v211, 4294901760
        %1460 = vmatpush1.xpose.msra.mxu0 %v1459
        %1461 = vmatprep.subr.mxu0 0.0
        %v1462 = vand.u32 %v212, 4294901760
        %1463 = vmatpush1.xpose.msra.mxu0 %v1462
        %1464 = vmatprep.subr.mxu0 0.0
        %v1465 = vand.u32 %v213, 4294901760
        %1466 = vmatpush1.xpose.msra.mxu0 %v1465
        %1467 = vmatprep.subr.mxu0 0.0
        %v1468 = vand.u32 %v214, 4294901760
        %1469 = vmatpush1.xpose.msra.mxu0 %v1468
        %1470 = vmatprep.subr.mxu0 0.0
        %v1471 = vand.u32 %v215, 4294901760
        %1472 = vmatpush1.xpose.msra.mxu0 %v1471
        %1473 = vmatprep.subr.mxu0 0.0
        %v1474 = vand.u32 %v216, 4294901760
        %1475 = vmatpush1.xpose.msra.mxu0 %v1474
        %1476 = vmatprep.subr.mxu0 0.0
        %v1477 = vand.u32 %v217, 4294901760
        %1478 = vmatpush1.xpose.msra.mxu0 %v1477
        %1479 = vmatprep.subr.mxu0 0.0
        %v1480 = vand.u32 %v218, 4294901760
        %1481 = vmatpush1.xpose.msra.mxu0 %v1480
        %1482 = vmatprep.subr.mxu0 0.0
        %v1483 = vand.u32 %v219, 4294901760
        %1484 = vmatpush1.xpose.msra.mxu0 %v1483
        %1485 = vmatprep.subr.mxu0 0.0
        %v1486 = vand.u32 %v220, 4294901760
        %1487 = vmatpush1.xpose.msra.mxu0 %v1486
        %1488 = vmatprep.subr.mxu0 0.0
        %v1489 = vand.u32 %v221, 4294901760
        %1490 = vmatpush1.xpose.msra.mxu0 %v1489
        %1491 = vmatprep.subr.mxu0 0.0
        %v1492 = vand.u32 %v222, 4294901760
        %1493 = vmatpush1.xpose.msra.mxu0 %v1492
        %1494 = vmatprep.subr.mxu0 0.0
        %v1495 = vand.u32 %v223, 4294901760
        %1496 = vmatpush1.xpose.msra.mxu0 %v1495
        %1497 = vmatprep.subr.mxu0 0.0
        %v1498 = vand.u32 %v224, 4294901760
        %1499 = vmatpush1.xpose.msra.mxu0 %v1498
        %1500 = vmatprep.subr.mxu0 0.0
        %v1501 = vand.u32 %v225, 4294901760
        %1502 = vmatpush1.xpose.msra.mxu0 %v1501
        %1503 = vmatprep.subr.mxu0 0.0
        %v1504 = vand.u32 %v226, 4294901760
        %1505 = vmatpush1.xpose.msra.mxu0 %v1504
        %1506 = vmatprep.subr.mxu0 0.0
        %v1507 = vand.u32 %v227, 4294901760
        %1508 = vmatpush1.xpose.msra.mxu0 %v1507
        %1509 = vmatprep.subr.mxu0 0.0
        %v1510 = vand.u32 %v228, 4294901760
        %1511 = vmatpush1.xpose.msra.mxu0 %v1510
        %1512 = vmatprep.subr.mxu0 0.0
        %v1513 = vand.u32 %v229, 4294901760
        %1514 = vmatpush1.xpose.msra.mxu0 %v1513
        %1515 = vmatprep.subr.mxu0 0.0
        %v1516 = vand.u32 %v230, 4294901760
        %1517 = vmatpush1.xpose.msra.mxu0 %v1516
        %1518 = vmatprep.subr.mxu0 0.0
        %v1519 = vand.u32 %v231, 4294901760
        %1520 = vmatpush1.xpose.msra.mxu0 %v1519
        %1521 = vmatprep.subr.mxu0 0.0
        %v1522 = vand.u32 %v232, 4294901760
        %1523 = vmatpush1.xpose.msra.mxu0 %v1522
        %1524 = vmatprep.subr.mxu0 0.0
        %v1525 = vand.u32 %v233, 4294901760
        %1526 = vmatpush1.xpose.msra.mxu0 %v1525
        %1527 = vmatprep.subr.mxu0 0.0
        %v1528 = vand.u32 %v234, 4294901760
        %1529 = vmatpush1.xpose.msra.mxu0 %v1528
        %1530 = vmatprep.subr.mxu0 0.0
        %v1531 = vand.u32 %v235, 4294901760
        %1532 = vmatpush1.xpose.msra.mxu0 %v1531
        %1533 = vmatprep.subr.mxu0 0.0
        %v1534 = vand.u32 %v236, 4294901760
        %1535 = vmatpush1.xpose.msra.mxu0 %v1534
        %1536 = vmatprep.subr.mxu0 0.0
        %v1537 = vand.u32 %v237, 4294901760
        %1538 = vmatpush1.xpose.msra.mxu0 %v1537
        %1539 = vmatprep.subr.mxu0 0.0
        %v1540 = vand.u32 %v238, 4294901760
        %1541 = vmatpush1.xpose.msra.mxu0 %v1540
        %1542 = vmatprep.subr.mxu0 0.0
        %v1543 = vand.u32 %v239, 4294901760
        %1544 = vmatpush1.xpose.msra.mxu0 %v1543
        %1545 = vmatprep.subr.mxu0 0.0
        %v1546 = vand.u32 %v240, 4294901760
        %1547 = vmatpush1.xpose.msra.mxu0 %v1546
        %1548 = vmatprep.subr.mxu0 0.0
        %v1549 = vand.u32 %v241, 4294901760
        %1550 = vmatpush1.xpose.msra.mxu0 %v1549
        %1551 = vmatprep.subr.mxu0 0.0
        %v1552 = vand.u32 %v242, 4294901760
        %1553 = vmatpush1.xpose.msra.mxu0 %v1552
        %1554 = vmatprep.mubr.f32.mxu0 0.0
        %v1555 = vand.u32 %v252, 4294901760
        %v1556 = vsub.f32 %v252, %v1555
        %v1557 = vand.u32 %v1556, 4294901760
        %v1558 = vsub.f32 %v1556, %v1557
        %v1559 = vand.u32 %v1558, 4294901760
        %1560 = vmatmul.mubr.f32.gmra.mrb[0].mxu0 %v1559
        %v1561 = vpop.f32.mrb[0].mxu0
        %v1562 = vadd.f32 0.0, %v1561
        %v1563 = vpop.f32.mrb[0].mxu0
        %v1564 = vadd.f32 0.0, %v1563
        %1565 = vmatprep.mubr.f32.mxu0 0.0
        %v1566 = vand.u32 %v253, 4294901760
        %v1567 = vsub.f32 %v253, %v1566
        %v1568 = vand.u32 %v1567, 4294901760
        %v1569 = vsub.f32 %v1567, %v1568
        %v1570 = vand.u32 %v1569, 4294901760
        %1571 = vmatmul.mubr.f32.gmra.mrb[0].mxu0 %v1570
        %v1572 = vpop.f32.mrb[0].mxu0
        %v1573 = vadd.f32 0.0, %v1572
        %v1574 = vpop.f32.mrb[0].mxu0
        %v1575 = vadd.f32 0.0, %v1574
        %1576 = vmatprep.mubr.f32.mxu0 0.0
        %v1577 = vand.u32 %v254, 4294901760
        %v1578 = vsub.f32 %v254, %v1577
        %v1579 = vand.u32 %v1578, 4294901760
        %v1580 = vsub.f32 %v1578, %v1579
        %v1581 = vand.u32 %v1580, 4294901760
        %1582 = vmatmul.mubr.f32.gmra.mrb[0].mxu0 %v1581
        %v1583 = vpop.f32.mrb[0].mxu0
        %v1584 = vadd.f32 0.0, %v1583
        %v1585 = vpop.f32.mrb[0].mxu0
        %v1586 = vadd.f32 0.0, %v1585
        %1587 = vmatprep.mubr.f32.mxu0 0.0
        %v1588 = vand.u32 %v255, 4294901760
        %v1589 = vsub.f32 %v255, %v1588
        %v1590 = vand.u32 %v1589, 4294901760
        %v1591 = vsub.f32 %v1589, %v1590
        %v1592 = vand.u32 %v1591, 4294901760
        %1593 = vmatmul.mubr.f32.gmra.mrb[0].mxu0 %v1592
        %v1594 = vpop.f32.mrb[0].mxu0
        %v1595 = vadd.f32 0.0, %v1594
        %v1596 = vpop.f32.mrb[0].mxu0
        %v1597 = vadd.f32 0.0, %v1596
        %1598 = vmatprep.mubr.f32.mxu0 0.0
        %v1599 = vand.u32 %v256, 4294901760
        %v1600 = vsub.f32 %v256, %v1599
        %v1601 = vand.u32 %v1600, 4294901760
        %v1602 = vsub.f32 %v1600, %v1601
        %v1603 = vand.u32 %v1602, 4294901760
        %1604 = vmatmul.mubr.f32.gmra.mrb[0].mxu0 %v1603
        %v1605 = vpop.f32.mrb[0].mxu0
        %v1606 = vadd.f32 0.0, %v1605
        %v1607 = vpop.f32.mrb[0].mxu0
        %v1608 = vadd.f32 0.0, %v1607
        %1609 = vmatprep.mubr.f32.mxu0 0.0
        %v1610 = vand.u32 %v257, 4294901760
        %v1611 = vsub.f32 %v257, %v1610
        %v1612 = vand.u32 %v1611, 4294901760
        %v1613 = vsub.f32 %v1611, %v1612
        %v1614 = vand.u32 %v1613, 4294901760
        %1615 = vmatmul.mubr.f32.gmra.mrb[0].mxu0 %v1614
        %v1616 = vpop.f32.mrb[0].mxu0
        %v1617 = vadd.f32 0.0, %v1616
        %v1618 = vpop.f32.mrb[0].mxu0
        %v1619 = vadd.f32 0.0, %v1618
        %1620 = vmatprep.mubr.f32.mxu0 0.0
        %v1621 = vand.u32 %v258, 4294901760
        %v1622 = vsub.f32 %v258, %v1621
        %v1623 = vand.u32 %v1622, 4294901760
        %v1624 = vsub.f32 %v1622, %v1623
        %v1625 = vand.u32 %v1624, 4294901760
        %1626 = vmatmul.mubr.f32.gmra.mrb[0].mxu0 %v1625
        %v1627 = vpop.f32.mrb[0].mxu0
        %v1628 = vadd.f32 0.0, %v1627
        %v1629 = vpop.f32.mrb[0].mxu0
        %v1630 = vadd.f32 0.0, %v1629
        %1631 = vmatprep.mubr.f32.mxu0 0.0
        %v1632 = vand.u32 %v259, 4294901760
        %v1633 = vsub.f32 %v259, %v1632
        %v1634 = vand.u32 %v1633, 4294901760
        %v1635 = vsub.f32 %v1633, %v1634
        %v1636 = vand.u32 %v1635, 4294901760
        %1637 = vmatmul.mubr.f32.gmra.mrb[0].mxu0 %v1636
        %v1638 = vpop.f32.mrb[0].mxu0
        %v1639 = vadd.f32 0.0, %v1638
        %v1640 = vpop.f32.mrb[0].mxu0
        %v1641 = vadd.f32 0.0, %v1640
        %1642 = vdwg.mxu0
        %1643 = vmatprep.subr.mxu0 0.0
        %v1644 = vand.u32 %v211, 4294901760
        %v1645 = vsub.f32 %v211, %v1644
        %v1646 = vand.u32 %v1645, 4294901760
        %v1647 = vsub.f32 %v1645, %v1646
        %v1648 = vand.u32 %v1647, 4294901760
        %1649 = vmatpush1.xpose.msra.mxu0 %v1648
        %1650 = vmatprep.subr.mxu0 0.0
        %v1651 = vand.u32 %v212, 4294901760
        %v1652 = vsub.f32 %v212, %v1651
        %v1653 = vand.u32 %v1652, 4294901760
        %v1654 = vsub.f32 %v1652, %v1653
        %v1655 = vand.u32 %v1654, 4294901760
        %1656 = vmatpush1.xpose.msra.mxu0 %v1655
        %1657 = vmatprep.subr.mxu0 0.0
        %v1658 = vand.u32 %v213, 4294901760
        %v1659 = vsub.f32 %v213, %v1658
        %v1660 = vand.u32 %v1659, 4294901760
        %v1661 = vsub.f32 %v1659, %v1660
        %v1662 = vand.u32 %v1661, 4294901760
        %1663 = vmatpush1.xpose.msra.mxu0 %v1662
        %1664 = vmatprep.subr.mxu0 0.0
        %v1665 = vand.u32 %v214, 4294901760
        %v1666 = vsub.f32 %v214, %v1665
        %v1667 = vand.u32 %v1666, 4294901760
        %v1668 = vsub.f32 %v1666, %v1667
        %v1669 = vand.u32 %v1668, 4294901760
        %1670 = vmatpush1.xpose.msra.mxu0 %v1669
        %1671 = vmatprep.subr.mxu0 0.0
        %v1672 = vand.u32 %v215, 4294901760
        %v1673 = vsub.f32 %v215, %v1672
        %v1674 = vand.u32 %v1673, 4294901760
        %v1675 = vsub.f32 %v1673, %v1674
        %v1676 = vand.u32 %v1675, 4294901760
        %1677 = vmatpush1.xpose.msra.mxu0 %v1676
        %1678 = vmatprep.subr.mxu0 0.0
        %v1679 = vand.u32 %v216, 4294901760
        %v1680 = vsub.f32 %v216, %v1679
        %v1681 = vand.u32 %v1680, 4294901760
        %v1682 = vsub.f32 %v1680, %v1681
        %v1683 = vand.u32 %v1682, 4294901760
        %1684 = vmatpush1.xpose.msra.mxu0 %v1683
        %1685 = vmatprep.subr.mxu0 0.0
        %v1686 = vand.u32 %v217, 4294901760
        %v1687 = vsub.f32 %v217, %v1686
        %v1688 = vand.u32 %v1687, 4294901760
        %v1689 = vsub.f32 %v1687, %v1688
        %v1690 = vand.u32 %v1689, 4294901760
        %1691 = vmatpush1.xpose.msra.mxu0 %v1690
        %1692 = vmatprep.subr.mxu0 0.0
        %v1693 = vand.u32 %v218, 4294901760
        %v1694 = vsub.f32 %v218, %v1693
        %v1695 = vand.u32 %v1694, 4294901760
        %v1696 = vsub.f32 %v1694, %v1695
        %v1697 = vand.u32 %v1696, 4294901760
        %1698 = vmatpush1.xpose.msra.mxu0 %v1697
        %1699 = vmatprep.subr.mxu0 0.0
        %v1700 = vand.u32 %v219, 4294901760
        %v1701 = vsub.f32 %v219, %v1700
        %v1702 = vand.u32 %v1701, 4294901760
        %v1703 = vsub.f32 %v1701, %v1702
        %v1704 = vand.u32 %v1703, 4294901760
        %1705 = vmatpush1.xpose.msra.mxu0 %v1704
        %1706 = vmatprep.subr.mxu0 0.0
        %v1707 = vand.u32 %v220, 4294901760
        %v1708 = vsub.f32 %v220, %v1707
        %v1709 = vand.u32 %v1708, 4294901760
        %v1710 = vsub.f32 %v1708, %v1709
        %v1711 = vand.u32 %v1710, 4294901760
        %1712 = vmatpush1.xpose.msra.mxu0 %v1711
        %1713 = vmatprep.subr.mxu0 0.0
        %v1714 = vand.u32 %v221, 4294901760
        %v1715 = vsub.f32 %v221, %v1714
        %v1716 = vand.u32 %v1715, 4294901760
        %v1717 = vsub.f32 %v1715, %v1716
        %v1718 = vand.u32 %v1717, 4294901760
        %1719 = vmatpush1.xpose.msra.mxu0 %v1718
        %1720 = vmatprep.subr.mxu0 0.0
        %v1721 = vand.u32 %v222, 4294901760
        %v1722 = vsub.f32 %v222, %v1721
        %v1723 = vand.u32 %v1722, 4294901760
        %v1724 = vsub.f32 %v1722, %v1723
        %v1725 = vand.u32 %v1724, 4294901760
        %1726 = vmatpush1.xpose.msra.mxu0 %v1725
        %1727 = vmatprep.subr.mxu0 0.0
        %v1728 = vand.u32 %v223, 4294901760
        %v1729 = vsub.f32 %v223, %v1728
        %v1730 = vand.u32 %v1729, 4294901760
        %v1731 = vsub.f32 %v1729, %v1730
        %v1732 = vand.u32 %v1731, 4294901760
        %1733 = vmatpush1.xpose.msra.mxu0 %v1732
        %1734 = vmatprep.subr.mxu0 0.0
        %v1735 = vand.u32 %v224, 4294901760
        %v1736 = vsub.f32 %v224, %v1735
        %v1737 = vand.u32 %v1736, 4294901760
        %v1738 = vsub.f32 %v1736, %v1737
        %v1739 = vand.u32 %v1738, 4294901760
        %1740 = vmatpush1.xpose.msra.mxu0 %v1739
        %1741 = vmatprep.subr.mxu0 0.0
        %v1742 = vand.u32 %v225, 4294901760
        %v1743 = vsub.f32 %v225, %v1742
        %v1744 = vand.u32 %v1743, 4294901760
        %v1745 = vsub.f32 %v1743, %v1744
        %v1746 = vand.u32 %v1745, 4294901760
        %1747 = vmatpush1.xpose.msra.mxu0 %v1746
        %1748 = vmatprep.subr.mxu0 0.0
        %v1749 = vand.u32 %v226, 4294901760
        %v1750 = vsub.f32 %v226, %v1749
        %v1751 = vand.u32 %v1750, 4294901760
        %v1752 = vsub.f32 %v1750, %v1751
        %v1753 = vand.u32 %v1752, 4294901760
        %1754 = vmatpush1.xpose.msra.mxu0 %v1753
        %1755 = vmatprep.subr.mxu0 0.0
        %v1756 = vand.u32 %v227, 4294901760
        %v1757 = vsub.f32 %v227, %v1756
        %v1758 = vand.u32 %v1757, 4294901760
        %v1759 = vsub.f32 %v1757, %v1758
        %v1760 = vand.u32 %v1759, 4294901760
        %1761 = vmatpush1.xpose.msra.mxu0 %v1760
        %1762 = vmatprep.subr.mxu0 0.0
        %v1763 = vand.u32 %v228, 4294901760
        %v1764 = vsub.f32 %v228, %v1763
        %v1765 = vand.u32 %v1764, 4294901760
        %v1766 = vsub.f32 %v1764, %v1765
        %v1767 = vand.u32 %v1766, 4294901760
        %1768 = vmatpush1.xpose.msra.mxu0 %v1767
        %1769 = vmatprep.subr.mxu0 0.0
        %v1770 = vand.u32 %v229, 4294901760
        %v1771 = vsub.f32 %v229, %v1770
        %v1772 = vand.u32 %v1771, 4294901760
        %v1773 = vsub.f32 %v1771, %v1772
        %v1774 = vand.u32 %v1773, 4294901760
        %1775 = vmatpush1.xpose.msra.mxu0 %v1774
        %1776 = vmatprep.subr.mxu0 0.0
        %v1777 = vand.u32 %v230, 4294901760
        %v1778 = vsub.f32 %v230, %v1777
        %v1779 = vand.u32 %v1778, 4294901760
        %v1780 = vsub.f32 %v1778, %v1779
        %v1781 = vand.u32 %v1780, 4294901760
        %1782 = vmatpush1.xpose.msra.mxu0 %v1781
        %1783 = vmatprep.subr.mxu0 0.0
        %v1784 = vand.u32 %v231, 4294901760
        %v1785 = vsub.f32 %v231, %v1784
        %v1786 = vand.u32 %v1785, 4294901760
        %v1787 = vsub.f32 %v1785, %v1786
        %v1788 = vand.u32 %v1787, 4294901760
        %1789 = vmatpush1.xpose.msra.mxu0 %v1788
        %1790 = vmatprep.subr.mxu0 0.0
        %v1791 = vand.u32 %v232, 4294901760
        %v1792 = vsub.f32 %v232, %v1791
        %v1793 = vand.u32 %v1792, 4294901760
        %v1794 = vsub.f32 %v1792, %v1793
        %v1795 = vand.u32 %v1794, 4294901760
        %1796 = vmatpush1.xpose.msra.mxu0 %v1795
        %1797 = vmatprep.subr.mxu0 0.0
        %v1798 = vand.u32 %v233, 4294901760
        %v1799 = vsub.f32 %v233, %v1798
        %v1800 = vand.u32 %v1799, 4294901760
        %v1801 = vsub.f32 %v1799, %v1800
        %v1802 = vand.u32 %v1801, 4294901760
        %1803 = vmatpush1.xpose.msra.mxu0 %v1802
        %1804 = vmatprep.subr.mxu0 0.0
        %v1805 = vand.u32 %v234, 4294901760
        %v1806 = vsub.f32 %v234, %v1805
        %v1807 = vand.u32 %v1806, 4294901760
        %v1808 = vsub.f32 %v1806, %v1807
        %v1809 = vand.u32 %v1808, 4294901760
        %1810 = vmatpush1.xpose.msra.mxu0 %v1809
        %1811 = vmatprep.subr.mxu0 0.0
        %v1812 = vand.u32 %v235, 4294901760
        %v1813 = vsub.f32 %v235, %v1812
        %v1814 = vand.u32 %v1813, 4294901760
        %v1815 = vsub.f32 %v1813, %v1814
        %v1816 = vand.u32 %v1815, 4294901760
        %1817 = vmatpush1.xpose.msra.mxu0 %v1816
        %1818 = vmatprep.subr.mxu0 0.0
        %v1819 = vand.u32 %v236, 4294901760
        %v1820 = vsub.f32 %v236, %v1819
        %v1821 = vand.u32 %v1820, 4294901760
        %v1822 = vsub.f32 %v1820, %v1821
        %v1823 = vand.u32 %v1822, 4294901760
        %1824 = vmatpush1.xpose.msra.mxu0 %v1823
        %1825 = vmatprep.subr.mxu0 0.0
        %v1826 = vand.u32 %v237, 4294901760
        %v1827 = vsub.f32 %v237, %v1826
        %v1828 = vand.u32 %v1827, 4294901760
        %v1829 = vsub.f32 %v1827, %v1828
        %v1830 = vand.u32 %v1829, 4294901760
        %1831 = vmatpush1.xpose.msra.mxu0 %v1830
        %1832 = vmatprep.subr.mxu0 0.0
        %v1833 = vand.u32 %v238, 4294901760
        %v1834 = vsub.f32 %v238, %v1833
        %v1835 = vand.u32 %v1834, 4294901760
        %v1836 = vsub.f32 %v1834, %v1835
        %v1837 = vand.u32 %v1836, 4294901760
        %1838 = vmatpush1.xpose.msra.mxu0 %v1837
        %1839 = vmatprep.subr.mxu0 0.0
        %v1840 = vand.u32 %v239, 4294901760
        %v1841 = vsub.f32 %v239, %v1840
        %v1842 = vand.u32 %v1841, 4294901760
        %v1843 = vsub.f32 %v1841, %v1842
        %v1844 = vand.u32 %v1843, 4294901760
        %1845 = vmatpush1.xpose.msra.mxu0 %v1844
        %1846 = vmatprep.subr.mxu0 0.0
        %v1847 = vand.u32 %v240, 4294901760
        %v1848 = vsub.f32 %v240, %v1847
        %v1849 = vand.u32 %v1848, 4294901760
        %v1850 = vsub.f32 %v1848, %v1849
        %v1851 = vand.u32 %v1850, 4294901760
        %1852 = vmatpush1.xpose.msra.mxu0 %v1851
        %1853 = vmatprep.subr.mxu0 0.0
        %v1854 = vand.u32 %v241, 4294901760
        %v1855 = vsub.f32 %v241, %v1854
        %v1856 = vand.u32 %v1855, 4294901760
        %v1857 = vsub.f32 %v1855, %v1856
        %v1858 = vand.u32 %v1857, 4294901760
        %1859 = vmatpush1.xpose.msra.mxu0 %v1858
        %1860 = vmatprep.subr.mxu0 0.0
        %v1861 = vand.u32 %v242, 4294901760
        %v1862 = vsub.f32 %v242, %v1861
        %v1863 = vand.u32 %v1862, 4294901760
        %v1864 = vsub.f32 %v1862, %v1863
        %v1865 = vand.u32 %v1864, 4294901760
        %1866 = vmatpush1.xpose.msra.mxu0 %v1865
        %1867 = vmatprep.mubr.f32.mxu0 0.0
        %v1868 = vand.u32 %v252, 4294901760
        %1869 = vmatmul.mubr.f32.gmra.mrb[0].mxu0 %v1868
        %v1870 = vpop.f32.mrb[0].mxu0
        %v1871 = vadd.f32 %v1562, %v1870
        %v1872 = vpop.f32.mrb[0].mxu0
        %v1873 = vadd.f32 %v1564, %v1872
        %1874 = vmatprep.mubr.f32.mxu0 0.0
        %v1875 = vand.u32 %v253, 4294901760
        %1876 = vmatmul.mubr.f32.gmra.mrb[0].mxu0 %v1875
        %v1877 = vpop.f32.mrb[0].mxu0
        %v1878 = vadd.f32 %v1573, %v1877
        %v1879 = vpop.f32.mrb[0].mxu0
        %v1880 = vadd.f32 %v1575, %v1879
        %1881 = vmatprep.mubr.f32.mxu0 0.0
        %v1882 = vand.u32 %v254, 4294901760
        %1883 = vmatmul.mubr.f32.gmra.mrb[0].mxu0 %v1882
        %v1884 = vpop.f32.mrb[0].mxu0
        %v1885 = vadd.f32 %v1584, %v1884
        %v1886 = vpop.f32.mrb[0].mxu0
        %v1887 = vadd.f32 %v1586, %v1886
        %1888 = vmatprep.mubr.f32.mxu0 0.0
        %v1889 = vand.u32 %v255, 4294901760
        %1890 = vmatmul.mubr.f32.gmra.mrb[0].mxu0 %v1889
        %v1891 = vpop.f32.mrb[0].mxu0
        %v1892 = vadd.f32 %v1595, %v1891
        %v1893 = vpop.f32.mrb[0].mxu0
        %v1894 = vadd.f32 %v1597, %v1893
        %1895 = vmatprep.mubr.f32.mxu0 0.0
        %v1896 = vand.u32 %v256, 4294901760
        %1897 = vmatmul.mubr.f32.gmra.mrb[0].mxu0 %v1896
        %v1898 = vpop.f32.mrb[0].mxu0
        %v1899 = vadd.f32 %v1606, %v1898
        %v1900 = vpop.f32.mrb[0].mxu0
        %v1901 = vadd.f32 %v1608, %v1900
        %1902 = vmatprep.mubr.f32.mxu0 0.0
        %v1903 = vand.u32 %v257, 4294901760
        %1904 = vmatmul.mubr.f32.gmra.mrb[0].mxu0 %v1903
        %v1905 = vpop.f32.mrb[0].mxu0
        %v1906 = vadd.f32 %v1617, %v1905
        %v1907 = vpop.f32.mrb[0].mxu0
        %v1908 = vadd.f32 %v1619, %v1907
        %1909 = vmatprep.mubr.f32.mxu0 0.0
        %v1910 = vand.u32 %v258, 4294901760
        %1911 = vmatmul.mubr.f32.gmra.mrb[0].mxu0 %v1910
        %v1912 = vpop.f32.mrb[0].mxu0
        %v1913 = vadd.f32 %v1628, %v1912
        %v1914 = vpop.f32.mrb[0].mxu0
        %v1915 = vadd.f32 %v1630, %v1914
        %1916 = vmatprep.mubr.f32.mxu0 0.0
        %v1917 = vand.u32 %v259, 4294901760
        %1918 = vmatmul.mubr.f32.gmra.mrb[0].mxu0 %v1917
        %v1919 = vpop.f32.mrb[0].mxu0
        %v1920 = vadd.f32 %v1639, %v1919
        %v1921 = vpop.f32.mrb[0].mxu0
        %v1922 = vadd.f32 %v1641, %v1921
        %1923 = vdwg.mxu0
        %1924 = vmatprep.subr.mxu0 0.0
        %v1925 = vand.u32 %v211, 4294901760
        %v1926 = vsub.f32 %v211, %v1925
        %1927 = vmatpush1.xpose.msra.mxu0 %v1926
        %1928 = vmatprep.subr.mxu0 0.0
        %v1929 = vand.u32 %v212, 4294901760
        %v1930 = vsub.f32 %v212, %v1929
        %1931 = vmatpush1.xpose.msra.mxu0 %v1930
        %1932 = vmatprep.subr.mxu0 0.0
        %v1933 = vand.u32 %v213, 4294901760
        %v1934 = vsub.f32 %v213, %v1933
        %1935 = vmatpush1.xpose.msra.mxu0 %v1934
        %1936 = vmatprep.subr.mxu0 0.0
        %v1937 = vand.u32 %v214, 4294901760
        %v1938 = vsub.f32 %v214, %v1937
        %1939 = vmatpush1.xpose.msra.mxu0 %v1938
        %1940 = vmatprep.subr.mxu0 0.0
        %v1941 = vand.u32 %v215, 4294901760
        %v1942 = vsub.f32 %v215, %v1941
        %1943 = vmatpush1.xpose.msra.mxu0 %v1942
        %1944 = vmatprep.subr.mxu0 0.0
        %v1945 = vand.u32 %v216, 4294901760
        %v1946 = vsub.f32 %v216, %v1945
        %1947 = vmatpush1.xpose.msra.mxu0 %v1946
        %1948 = vmatprep.subr.mxu0 0.0
        %v1949 = vand.u32 %v217, 4294901760
        %v1950 = vsub.f32 %v217, %v1949
        %1951 = vmatpush1.xpose.msra.mxu0 %v1950
        %1952 = vmatprep.subr.mxu0 0.0
        %v1953 = vand.u32 %v218, 4294901760
        %v1954 = vsub.f32 %v218, %v1953
        %1955 = vmatpush1.xpose.msra.mxu0 %v1954
        %1956 = vmatprep.subr.mxu0 0.0
        %v1957 = vand.u32 %v219, 4294901760
        %v1958 = vsub.f32 %v219, %v1957
        %1959 = vmatpush1.xpose.msra.mxu0 %v1958
        %1960 = vmatprep.subr.mxu0 0.0
        %v1961 = vand.u32 %v220, 4294901760
        %v1962 = vsub.f32 %v220, %v1961
        %1963 = vmatpush1.xpose.msra.mxu0 %v1962
        %1964 = vmatprep.subr.mxu0 0.0
        %v1965 = vand.u32 %v221, 4294901760
        %v1966 = vsub.f32 %v221, %v1965
        %1967 = vmatpush1.xpose.msra.mxu0 %v1966
        %1968 = vmatprep.subr.mxu0 0.0
        %v1969 = vand.u32 %v222, 4294901760
        %v1970 = vsub.f32 %v222, %v1969
        %1971 = vmatpush1.xpose.msra.mxu0 %v1970
        %1972 = vmatprep.subr.mxu0 0.0
        %v1973 = vand.u32 %v223, 4294901760
        %v1974 = vsub.f32 %v223, %v1973
        %1975 = vmatpush1.xpose.msra.mxu0 %v1974
        %1976 = vmatprep.subr.mxu0 0.0
        %v1977 = vand.u32 %v224, 4294901760
        %v1978 = vsub.f32 %v224, %v1977
        %1979 = vmatpush1.xpose.msra.mxu0 %v1978
        %1980 = vmatprep.subr.mxu0 0.0
        %v1981 = vand.u32 %v225, 4294901760
        %v1982 = vsub.f32 %v225, %v1981
        %1983 = vmatpush1.xpose.msra.mxu0 %v1982
        %1984 = vmatprep.subr.mxu0 0.0
        %v1985 = vand.u32 %v226, 4294901760
        %v1986 = vsub.f32 %v226, %v1985
        %1987 = vmatpush1.xpose.msra.mxu0 %v1986
        %1988 = vmatprep.subr.mxu0 0.0
        %v1989 = vand.u32 %v227, 4294901760
        %v1990 = vsub.f32 %v227, %v1989
        %1991 = vmatpush1.xpose.msra.mxu0 %v1990
        %1992 = vmatprep.subr.mxu0 0.0
        %v1993 = vand.u32 %v228, 4294901760
        %v1994 = vsub.f32 %v228, %v1993
        %1995 = vmatpush1.xpose.msra.mxu0 %v1994
        %1996 = vmatprep.subr.mxu0 0.0
        %v1997 = vand.u32 %v229, 4294901760
        %v1998 = vsub.f32 %v229, %v1997
        %1999 = vmatpush1.xpose.msra.mxu0 %v1998
        %2000 = vmatprep.subr.mxu0 0.0
        %v2001 = vand.u32 %v230, 4294901760
        %v2002 = vsub.f32 %v230, %v2001
        %2003 = vmatpush1.xpose.msra.mxu0 %v2002
        %2004 = vmatprep.subr.mxu0 0.0
        %v2005 = vand.u32 %v231, 4294901760
        %v2006 = vsub.f32 %v231, %v2005
        %2007 = vmatpush1.xpose.msra.mxu0 %v2006
        %2008 = vmatprep.subr.mxu0 0.0
        %v2009 = vand.u32 %v232, 4294901760
        %v2010 = vsub.f32 %v232, %v2009
        %2011 = vmatpush1.xpose.msra.mxu0 %v2010
        %2012 = vmatprep.subr.mxu0 0.0
        %v2013 = vand.u32 %v233, 4294901760
        %v2014 = vsub.f32 %v233, %v2013
        %2015 = vmatpush1.xpose.msra.mxu0 %v2014
        %2016 = vmatprep.subr.mxu0 0.0
        %v2017 = vand.u32 %v234, 4294901760
        %v2018 = vsub.f32 %v234, %v2017
        %2019 = vmatpush1.xpose.msra.mxu0 %v2018
        %2020 = vmatprep.subr.mxu0 0.0
        %v2021 = vand.u32 %v235, 4294901760
        %v2022 = vsub.f32 %v235, %v2021
        %2023 = vmatpush1.xpose.msra.mxu0 %v2022
        %2024 = vmatprep.subr.mxu0 0.0
        %v2025 = vand.u32 %v236, 4294901760
        %v2026 = vsub.f32 %v236, %v2025
        %2027 = vmatpush1.xpose.msra.mxu0 %v2026
        %2028 = vmatprep.subr.mxu0 0.0
        %v2029 = vand.u32 %v237, 4294901760
        %v2030 = vsub.f32 %v237, %v2029
        %2031 = vmatpush1.xpose.msra.mxu0 %v2030
        %2032 = vmatprep.subr.mxu0 0.0
        %v2033 = vand.u32 %v238, 4294901760
        %v2034 = vsub.f32 %v238, %v2033
        %2035 = vmatpush1.xpose.msra.mxu0 %v2034
        %2036 = vmatprep.subr.mxu0 0.0
        %v2037 = vand.u32 %v239, 4294901760
        %v2038 = vsub.f32 %v239, %v2037
        %2039 = vmatpush1.xpose.msra.mxu0 %v2038
        %2040 = vmatprep.subr.mxu0 0.0
        %v2041 = vand.u32 %v240, 4294901760
        %v2042 = vsub.f32 %v240, %v2041
        %2043 = vmatpush1.xpose.msra.mxu0 %v2042
        %2044 = vmatprep.subr.mxu0 0.0
        %v2045 = vand.u32 %v241, 4294901760
        %v2046 = vsub.f32 %v241, %v2045
        %2047 = vmatpush1.xpose.msra.mxu0 %v2046
        %2048 = vmatprep.subr.mxu0 0.0
        %v2049 = vand.u32 %v242, 4294901760
        %v2050 = vsub.f32 %v242, %v2049
        %2051 = vmatpush1.xpose.msra.mxu0 %v2050
        %2052 = vmatprep.mubr.f32.mxu0 0.0
        %v2053 = vand.u32 %v252, 4294901760
        %v2054 = vsub.f32 %v252, %v2053
        %2055 = vmatmul.mubr.f32.gmra.mrb[0].mxu0 %v2054
        %v2056 = vpop.f32.mrb[0].mxu0
        %v2057 = vadd.f32 %v1871, %v2056
        %v2058 = vpop.f32.mrb[0].mxu0
        %v2059 = vadd.f32 %v1873, %v2058
        %2060 = vmatprep.mubr.f32.mxu0 0.0
        %v2061 = vand.u32 %v253, 4294901760
        %v2062 = vsub.f32 %v253, %v2061
        %2063 = vmatmul.mubr.f32.gmra.mrb[0].mxu0 %v2062
        %v2064 = vpop.f32.mrb[0].mxu0
        %v2065 = vadd.f32 %v1878, %v2064
        %v2066 = vpop.f32.mrb[0].mxu0
        %v2067 = vadd.f32 %v1880, %v2066
        %2068 = vmatprep.mubr.f32.mxu0 0.0
        %v2069 = vand.u32 %v254, 4294901760
        %v2070 = vsub.f32 %v254, %v2069
        %2071 = vmatmul.mubr.f32.gmra.mrb[0].mxu0 %v2070
        %v2072 = vpop.f32.mrb[0].mxu0
        %v2073 = vadd.f32 %v1885, %v2072
        %v2074 = vpop.f32.mrb[0].mxu0
        %v2075 = vadd.f32 %v1887, %v2074
        %2076 = vmatprep.mubr.f32.mxu0 0.0
        %v2077 = vand.u32 %v255, 4294901760
        %v2078 = vsub.f32 %v255, %v2077
        %2079 = vmatmul.mubr.f32.gmra.mrb[0].mxu0 %v2078
        %v2080 = vpop.f32.mrb[0].mxu0
        %v2081 = vadd.f32 %v1892, %v2080
        %v2082 = vpop.f32.mrb[0].mxu0
        %v2083 = vadd.f32 %v1894, %v2082
        %2084 = vmatprep.mubr.f32.mxu0 0.0
        %v2085 = vand.u32 %v256, 4294901760
        %v2086 = vsub.f32 %v256, %v2085
        %2087 = vmatmul.mubr.f32.gmra.mrb[0].mxu0 %v2086
        %v2088 = vpop.f32.mrb[0].mxu0
        %v2089 = vadd.f32 %v1899, %v2088
        %v2090 = vpop.f32.mrb[0].mxu0
        %v2091 = vadd.f32 %v1901, %v2090
        %2092 = vmatprep.mubr.f32.mxu0 0.0
        %v2093 = vand.u32 %v257, 4294901760
        %v2094 = vsub.f32 %v257, %v2093
        %2095 = vmatmul.mubr.f32.gmra.mrb[0].mxu0 %v2094
        %v2096 = vpop.f32.mrb[0].mxu0
        %v2097 = vadd.f32 %v1906, %v2096
        %v2098 = vpop.f32.mrb[0].mxu0
        %v2099 = vadd.f32 %v1908, %v2098
        %2100 = vmatprep.mubr.f32.mxu0 0.0
        %v2101 = vand.u32 %v258, 4294901760
        %v2102 = vsub.f32 %v258, %v2101
        %2103 = vmatmul.mubr.f32.gmra.mrb[0].mxu0 %v2102
        %v2104 = vpop.f32.mrb[0].mxu0
        %v2105 = vadd.f32 %v1913, %v2104
        %v2106 = vpop.f32.mrb[0].mxu0
        %v2107 = vadd.f32 %v1915, %v2106
        %2108 = vmatprep.mubr.f32.mxu0 0.0
        %v2109 = vand.u32 %v259, 4294901760
        %v2110 = vsub.f32 %v259, %v2109
        %2111 = vmatmul.mubr.f32.gmra.mrb[0].mxu0 %v2110
        %v2112 = vpop.f32.mrb[0].mxu0
        %v2113 = vadd.f32 %v1920, %v2112
        %v2114 = vpop.f32.mrb[0].mxu0
        %v2115 = vadd.f32 %v1922, %v2114
        %2116 = vdwg.mxu0
        %2117 = vmatprep.subr.mxu0 0.0
        %v2118 = vand.u32 %v211, 4294901760
        %2119 = vmatpush1.xpose.msra.mxu0 %v2118
        %2120 = vmatprep.subr.mxu0 0.0
        %v2121 = vand.u32 %v212, 4294901760
        %2122 = vmatpush1.xpose.msra.mxu0 %v2121
        %2123 = vmatprep.subr.mxu0 0.0
        %v2124 = vand.u32 %v213, 4294901760
        %2125 = vmatpush1.xpose.msra.mxu0 %v2124
        %2126 = vmatprep.subr.mxu0 0.0
        %v2127 = vand.u32 %v214, 4294901760
        %2128 = vmatpush1.xpose.msra.mxu0 %v2127
        %2129 = vmatprep.subr.mxu0 0.0
        %v2130 = vand.u32 %v215, 4294901760
        %2131 = vmatpush1.xpose.msra.mxu0 %v2130
        %2132 = vmatprep.subr.mxu0 0.0
        %v2133 = vand.u32 %v216, 4294901760
        %2134 = vmatpush1.xpose.msra.mxu0 %v2133
        %2135 = vmatprep.subr.mxu0 0.0
        %v2136 = vand.u32 %v217, 4294901760
        %2137 = vmatpush1.xpose.msra.mxu0 %v2136
        %2138 = vmatprep.subr.mxu0 0.0
        %v2139 = vand.u32 %v218, 4294901760
        %2140 = vmatpush1.xpose.msra.mxu0 %v2139
        %2141 = vmatprep.subr.mxu0 0.0
        %v2142 = vand.u32 %v219, 4294901760
        %2143 = vmatpush1.xpose.msra.mxu0 %v2142
        %2144 = vmatprep.subr.mxu0 0.0
        %v2145 = vand.u32 %v220, 4294901760
        %2146 = vmatpush1.xpose.msra.mxu0 %v2145
        %2147 = vmatprep.subr.mxu0 0.0
        %v2148 = vand.u32 %v221, 4294901760
        %2149 = vmatpush1.xpose.msra.mxu0 %v2148
        %2150 = vmatprep.subr.mxu0 0.0
        %v2151 = vand.u32 %v222, 4294901760
        %2152 = vmatpush1.xpose.msra.mxu0 %v2151
        %2153 = vmatprep.subr.mxu0 0.0
        %v2154 = vand.u32 %v223, 4294901760
        %2155 = vmatpush1.xpose.msra.mxu0 %v2154
        %2156 = vmatprep.subr.mxu0 0.0
        %v2157 = vand.u32 %v224, 4294901760
        %2158 = vmatpush1.xpose.msra.mxu0 %v2157
        %2159 = vmatprep.subr.mxu0 0.0
        %v2160 = vand.u32 %v225, 4294901760
        %2161 = vmatpush1.xpose.msra.mxu0 %v2160
        %2162 = vmatprep.subr.mxu0 0.0
        %v2163 = vand.u32 %v226, 4294901760
        %2164 = vmatpush1.xpose.msra.mxu0 %v2163
        %2165 = vmatprep.subr.mxu0 0.0
        %v2166 = vand.u32 %v227, 4294901760
        %2167 = vmatpush1.xpose.msra.mxu0 %v2166
        %2168 = vmatprep.subr.mxu0 0.0
        %v2169 = vand.u32 %v228, 4294901760
        %2170 = vmatpush1.xpose.msra.mxu0 %v2169
        %2171 = vmatprep.subr.mxu0 0.0
        %v2172 = vand.u32 %v229, 4294901760
        %2173 = vmatpush1.xpose.msra.mxu0 %v2172
        %2174 = vmatprep.subr.mxu0 0.0
        %v2175 = vand.u32 %v230, 4294901760
        %2176 = vmatpush1.xpose.msra.mxu0 %v2175
        %2177 = vmatprep.subr.mxu0 0.0
        %v2178 = vand.u32 %v231, 4294901760
        %2179 = vmatpush1.xpose.msra.mxu0 %v2178
        %2180 = vmatprep.subr.mxu0 0.0
        %v2181 = vand.u32 %v232, 4294901760
        %2182 = vmatpush1.xpose.msra.mxu0 %v2181
        %2183 = vmatprep.subr.mxu0 0.0
        %v2184 = vand.u32 %v233, 4294901760
        %2185 = vmatpush1.xpose.msra.mxu0 %v2184
        %2186 = vmatprep.subr.mxu0 0.0
        %v2187 = vand.u32 %v234, 4294901760
        %2188 = vmatpush1.xpose.msra.mxu0 %v2187
        %2189 = vmatprep.subr.mxu0 0.0
        %v2190 = vand.u32 %v235, 4294901760
        %2191 = vmatpush1.xpose.msra.mxu0 %v2190
        %2192 = vmatprep.subr.mxu0 0.0
        %v2193 = vand.u32 %v236, 4294901760
        %2194 = vmatpush1.xpose.msra.mxu0 %v2193
        %2195 = vmatprep.subr.mxu0 0.0
        %v2196 = vand.u32 %v237, 4294901760
        %2197 = vmatpush1.xpose.msra.mxu0 %v2196
        %2198 = vmatprep.subr.mxu0 0.0
        %v2199 = vand.u32 %v238, 4294901760
        %2200 = vmatpush1.xpose.msra.mxu0 %v2199
        %2201 = vmatprep.subr.mxu0 0.0
        %v2202 = vand.u32 %v239, 4294901760
        %2203 = vmatpush1.xpose.msra.mxu0 %v2202
        %2204 = vmatprep.subr.mxu0 0.0
        %v2205 = vand.u32 %v240, 4294901760
        %2206 = vmatpush1.xpose.msra.mxu0 %v2205
        %2207 = vmatprep.subr.mxu0 0.0
        %v2208 = vand.u32 %v241, 4294901760
        %2209 = vmatpush1.xpose.msra.mxu0 %v2208
        %2210 = vmatprep.subr.mxu0 0.0
        %v2211 = vand.u32 %v242, 4294901760
        %2212 = vmatpush1.xpose.msra.mxu0 %v2211
        %2213 = vmatprep.mubr.f32.mxu0 0.0
        %v2214 = vand.u32 %v252, 4294901760
        %v2215 = vsub.f32 %v252, %v2214
        %v2216 = vand.u32 %v2215, 4294901760
        %2217 = vmatmul.mubr.f32.gmra.mrb[0].mxu0 %v2216
        %v2218 = vpop.f32.mrb[0].mxu0
        %v2219 = vadd.f32 %v2057, %v2218
        %v2220 = vpop.f32.mrb[0].mxu0
        %v2221 = vadd.f32 %v2059, %v2220
        %2222 = vmatprep.mubr.f32.mxu0 0.0
        %v2223 = vand.u32 %v253, 4294901760
        %v2224 = vsub.f32 %v253, %v2223
        %v2225 = vand.u32 %v2224, 4294901760
        %2226 = vmatmul.mubr.f32.gmra.mrb[0].mxu0 %v2225
        %v2227 = vpop.f32.mrb[0].mxu0
        %v2228 = vadd.f32 %v2065, %v2227
        %v2229 = vpop.f32.mrb[0].mxu0
        %v2230 = vadd.f32 %v2067, %v2229
        %2231 = vmatprep.mubr.f32.mxu0 0.0
        %v2232 = vand.u32 %v254, 4294901760
        %v2233 = vsub.f32 %v254, %v2232
        %v2234 = vand.u32 %v2233, 4294901760
        %2235 = vmatmul.mubr.f32.gmra.mrb[0].mxu0 %v2234
        %v2236 = vpop.f32.mrb[0].mxu0
        %v2237 = vadd.f32 %v2073, %v2236
        %v2238 = vpop.f32.mrb[0].mxu0
        %v2239 = vadd.f32 %v2075, %v2238
        %2240 = vmatprep.mubr.f32.mxu0 0.0
        %v2241 = vand.u32 %v255, 4294901760
        %v2242 = vsub.f32 %v255, %v2241
        %v2243 = vand.u32 %v2242, 4294901760
        %2244 = vmatmul.mubr.f32.gmra.mrb[0].mxu0 %v2243
        %v2245 = vpop.f32.mrb[0].mxu0
        %v2246 = vadd.f32 %v2081, %v2245
        %v2247 = vpop.f32.mrb[0].mxu0
        %v2248 = vadd.f32 %v2083, %v2247
        %2249 = vmatprep.mubr.f32.mxu0 0.0
        %v2250 = vand.u32 %v256, 4294901760
        %v2251 = vsub.f32 %v256, %v2250
        %v2252 = vand.u32 %v2251, 4294901760
        %2253 = vmatmul.mubr.f32.gmra.mrb[0].mxu0 %v2252
        %v2254 = vpop.f32.mrb[0].mxu0
        %v2255 = vadd.f32 %v2089, %v2254
        %v2256 = vpop.f32.mrb[0].mxu0
        %v2257 = vadd.f32 %v2091, %v2256
        %2258 = vmatprep.mubr.f32.mxu0 0.0
        %v2259 = vand.u32 %v257, 4294901760
        %v2260 = vsub.f32 %v257, %v2259
        %v2261 = vand.u32 %v2260, 4294901760
        %2262 = vmatmul.mubr.f32.gmra.mrb[0].mxu0 %v2261
        %v2263 = vpop.f32.mrb[0].mxu0
        %v2264 = vadd.f32 %v2097, %v2263
        %v2265 = vpop.f32.mrb[0].mxu0
        %v2266 = vadd.f32 %v2099, %v2265
        %2267 = vmatprep.mubr.f32.mxu0 0.0
        %v2268 = vand.u32 %v258, 4294901760
        %v2269 = vsub.f32 %v258, %v2268
        %v2270 = vand.u32 %v2269, 4294901760
        %2271 = vmatmul.mubr.f32.gmra.mrb[0].mxu0 %v2270
        %v2272 = vpop.f32.mrb[0].mxu0
        %v2273 = vadd.f32 %v2105, %v2272
        %v2274 = vpop.f32.mrb[0].mxu0
        %v2275 = vadd.f32 %v2107, %v2274
        %2276 = vmatprep.mubr.f32.mxu0 0.0
        %v2277 = vand.u32 %v259, 4294901760
        %v2278 = vsub.f32 %v259, %v2277
        %v2279 = vand.u32 %v2278, 4294901760
        %2280 = vmatmul.mubr.f32.gmra.mrb[0].mxu0 %v2279
        %v2281 = vpop.f32.mrb[0].mxu0
        %v2282 = vadd.f32 %v2113, %v2281
        %v2283 = vpop.f32.mrb[0].mxu0
        %v2284 = vadd.f32 %v2115, %v2283
        %2285 = vdwg.mxu0
        %2286 = vmatprep.subr.mxu0 0.0
        %v2287 = vand.u32 %v211, 4294901760
        %v2288 = vsub.f32 %v211, %v2287
        %v2289 = vand.u32 %v2288, 4294901760
        %2290 = vmatpush1.xpose.msra.mxu0 %v2289
        %2291 = vmatprep.subr.mxu0 0.0
        %v2292 = vand.u32 %v212, 4294901760
        %v2293 = vsub.f32 %v212, %v2292
        %v2294 = vand.u32 %v2293, 4294901760
        %2295 = vmatpush1.xpose.msra.mxu0 %v2294
        %2296 = vmatprep.subr.mxu0 0.0
        %v2297 = vand.u32 %v213, 4294901760
        %v2298 = vsub.f32 %v213, %v2297
        %v2299 = vand.u32 %v2298, 4294901760
        %2300 = vmatpush1.xpose.msra.mxu0 %v2299
        %2301 = vmatprep.subr.mxu0 0.0
        %v2302 = vand.u32 %v214, 4294901760
        %v2303 = vsub.f32 %v214, %v2302
        %v2304 = vand.u32 %v2303, 4294901760
        %2305 = vmatpush1.xpose.msra.mxu0 %v2304
        %2306 = vmatprep.subr.mxu0 0.0
        %v2307 = vand.u32 %v215, 4294901760
        %v2308 = vsub.f32 %v215, %v2307
        %v2309 = vand.u32 %v2308, 4294901760
        %2310 = vmatpush1.xpose.msra.mxu0 %v2309
        %2311 = vmatprep.subr.mxu0 0.0
        %v2312 = vand.u32 %v216, 4294901760
        %v2313 = vsub.f32 %v216, %v2312
        %v2314 = vand.u32 %v2313, 4294901760
        %2315 = vmatpush1.xpose.msra.mxu0 %v2314
        %2316 = vmatprep.subr.mxu0 0.0
        %v2317 = vand.u32 %v217, 4294901760
        %v2318 = vsub.f32 %v217, %v2317
        %v2319 = vand.u32 %v2318, 4294901760
        %2320 = vmatpush1.xpose.msra.mxu0 %v2319
        %2321 = vmatprep.subr.mxu0 0.0
        %v2322 = vand.u32 %v218, 4294901760
        %v2323 = vsub.f32 %v218, %v2322
        %v2324 = vand.u32 %v2323, 4294901760
        %2325 = vmatpush1.xpose.msra.mxu0 %v2324
        %2326 = vmatprep.subr.mxu0 0.0
        %v2327 = vand.u32 %v219, 4294901760
        %v2328 = vsub.f32 %v219, %v2327
        %v2329 = vand.u32 %v2328, 4294901760
        %2330 = vmatpush1.xpose.msra.mxu0 %v2329
        %2331 = vmatprep.subr.mxu0 0.0
        %v2332 = vand.u32 %v220, 4294901760
        %v2333 = vsub.f32 %v220, %v2332
        %v2334 = vand.u32 %v2333, 4294901760
        %2335 = vmatpush1.xpose.msra.mxu0 %v2334
        %2336 = vmatprep.subr.mxu0 0.0
        %v2337 = vand.u32 %v221, 4294901760
        %v2338 = vsub.f32 %v221, %v2337
        %v2339 = vand.u32 %v2338, 4294901760
        %2340 = vmatpush1.xpose.msra.mxu0 %v2339
        %2341 = vmatprep.subr.mxu0 0.0
        %v2342 = vand.u32 %v222, 4294901760
        %v2343 = vsub.f32 %v222, %v2342
        %v2344 = vand.u32 %v2343, 4294901760
        %2345 = vmatpush1.xpose.msra.mxu0 %v2344
        %2346 = vmatprep.subr.mxu0 0.0
        %v2347 = vand.u32 %v223, 4294901760
        %v2348 = vsub.f32 %v223, %v2347
        %v2349 = vand.u32 %v2348, 4294901760
        %2350 = vmatpush1.xpose.msra.mxu0 %v2349
        %2351 = vmatprep.subr.mxu0 0.0
        %v2352 = vand.u32 %v224, 4294901760
        %v2353 = vsub.f32 %v224, %v2352
        %v2354 = vand.u32 %v2353, 4294901760
        %2355 = vmatpush1.xpose.msra.mxu0 %v2354
        %2356 = vmatprep.subr.mxu0 0.0
        %v2357 = vand.u32 %v225, 4294901760
        %v2358 = vsub.f32 %v225, %v2357
        %v2359 = vand.u32 %v2358, 4294901760
        %2360 = vmatpush1.xpose.msra.mxu0 %v2359
        %2361 = vmatprep.subr.mxu0 0.0
        %v2362 = vand.u32 %v226, 4294901760
        %v2363 = vsub.f32 %v226, %v2362
        %v2364 = vand.u32 %v2363, 4294901760
        %2365 = vmatpush1.xpose.msra.mxu0 %v2364
        %2366 = vmatprep.subr.mxu0 0.0
        %v2367 = vand.u32 %v227, 4294901760
        %v2368 = vsub.f32 %v227, %v2367
        %v2369 = vand.u32 %v2368, 4294901760
        %2370 = vmatpush1.xpose.msra.mxu0 %v2369
        %2371 = vmatprep.subr.mxu0 0.0
        %v2372 = vand.u32 %v228, 4294901760
        %v2373 = vsub.f32 %v228, %v2372
        %v2374 = vand.u32 %v2373, 4294901760
        %2375 = vmatpush1.xpose.msra.mxu0 %v2374
        %2376 = vmatprep.subr.mxu0 0.0
        %v2377 = vand.u32 %v229, 4294901760
        %v2378 = vsub.f32 %v229, %v2377
        %v2379 = vand.u32 %v2378, 4294901760
        %2380 = vmatpush1.xpose.msra.mxu0 %v2379
        %2381 = vmatprep.subr.mxu0 0.0
        %v2382 = vand.u32 %v230, 4294901760
        %v2383 = vsub.f32 %v230, %v2382
        %v2384 = vand.u32 %v2383, 4294901760
        %2385 = vmatpush1.xpose.msra.mxu0 %v2384
        %2386 = vmatprep.subr.mxu0 0.0
        %v2387 = vand.u32 %v231, 4294901760
        %v2388 = vsub.f32 %v231, %v2387
        %v2389 = vand.u32 %v2388, 4294901760
        %2390 = vmatpush1.xpose.msra.mxu0 %v2389
        %2391 = vmatprep.subr.mxu0 0.0
        %v2392 = vand.u32 %v232, 4294901760
        %v2393 = vsub.f32 %v232, %v2392
        %v2394 = vand.u32 %v2393, 4294901760
        %2395 = vmatpush1.xpose.msra.mxu0 %v2394
        %2396 = vmatprep.subr.mxu0 0.0
        %v2397 = vand.u32 %v233, 4294901760
        %v2398 = vsub.f32 %v233, %v2397
        %v2399 = vand.u32 %v2398, 4294901760
        %2400 = vmatpush1.xpose.msra.mxu0 %v2399
        %2401 = vmatprep.subr.mxu0 0.0
        %v2402 = vand.u32 %v234, 4294901760
        %v2403 = vsub.f32 %v234, %v2402
        %v2404 = vand.u32 %v2403, 4294901760
        %2405 = vmatpush1.xpose.msra.mxu0 %v2404
        %2406 = vmatprep.subr.mxu0 0.0
        %v2407 = vand.u32 %v235, 4294901760
        %v2408 = vsub.f32 %v235, %v2407
        %v2409 = vand.u32 %v2408, 4294901760
        %2410 = vmatpush1.xpose.msra.mxu0 %v2409
        %2411 = vmatprep.subr.mxu0 0.0
        %v2412 = vand.u32 %v236, 4294901760
        %v2413 = vsub.f32 %v236, %v2412
        %v2414 = vand.u32 %v2413, 4294901760
        %2415 = vmatpush1.xpose.msra.mxu0 %v2414
        %2416 = vmatprep.subr.mxu0 0.0
        %v2417 = vand.u32 %v237, 4294901760
        %v2418 = vsub.f32 %v237, %v2417
        %v2419 = vand.u32 %v2418, 4294901760
        %2420 = vmatpush1.xpose.msra.mxu0 %v2419
        %2421 = vmatprep.subr.mxu0 0.0
        %v2422 = vand.u32 %v238, 4294901760
        %v2423 = vsub.f32 %v238, %v2422
        %v2424 = vand.u32 %v2423, 4294901760
        %2425 = vmatpush1.xpose.msra.mxu0 %v2424
        %2426 = vmatprep.subr.mxu0 0.0
        %v2427 = vand.u32 %v239, 4294901760
        %v2428 = vsub.f32 %v239, %v2427
        %v2429 = vand.u32 %v2428, 4294901760
        %2430 = vmatpush1.xpose.msra.mxu0 %v2429
        %2431 = vmatprep.subr.mxu0 0.0
        %v2432 = vand.u32 %v240, 4294901760
        %v2433 = vsub.f32 %v240, %v2432
        %v2434 = vand.u32 %v2433, 4294901760
        %2435 = vmatpush1.xpose.msra.mxu0 %v2434
        %2436 = vmatprep.subr.mxu0 0.0
        %v2437 = vand.u32 %v241, 4294901760
        %v2438 = vsub.f32 %v241, %v2437
        %v2439 = vand.u32 %v2438, 4294901760
        %2440 = vmatpush1.xpose.msra.mxu0 %v2439
        %2441 = vmatprep.subr.mxu0 0.0
        %v2442 = vand.u32 %v242, 4294901760
        %v2443 = vsub.f32 %v242, %v2442
        %v2444 = vand.u32 %v2443, 4294901760
        %2445 = vmatpush1.xpose.msra.mxu0 %v2444
        %2446 = vmatprep.mubr.f32.mxu0 0.0
        %v2447 = vand.u32 %v252, 4294901760
        %2448 = vmatmul.mubr.f32.gmra.mrb[0].mxu0 %v2447
        %v2449 = vpop.f32.mrb[0].mxu0
        %v2450 = vadd.f32 %v2219, %v2449
        %v2451 = vpop.f32.mrb[0].mxu0
        %v2452 = vadd.f32 %v2221, %v2451
        %2453 = vmatprep.mubr.f32.mxu0 0.0
        %v2454 = vand.u32 %v253, 4294901760
        %2455 = vmatmul.mubr.f32.gmra.mrb[0].mxu0 %v2454
        %v2456 = vpop.f32.mrb[0].mxu0
        %v2457 = vadd.f32 %v2228, %v2456
        %v2458 = vpop.f32.mrb[0].mxu0
        %v2459 = vadd.f32 %v2230, %v2458
        %2460 = vmatprep.mubr.f32.mxu0 0.0
        %v2461 = vand.u32 %v254, 4294901760
        %2462 = vmatmul.mubr.f32.gmra.mrb[0].mxu0 %v2461
        %v2463 = vpop.f32.mrb[0].mxu0
        %v2464 = vadd.f32 %v2237, %v2463
        %v2465 = vpop.f32.mrb[0].mxu0
        %v2466 = vadd.f32 %v2239, %v2465
        %2467 = vmatprep.mubr.f32.mxu0 0.0
        %v2468 = vand.u32 %v255, 4294901760
        %2469 = vmatmul.mubr.f32.gmra.mrb[0].mxu0 %v2468
        %v2470 = vpop.f32.mrb[0].mxu0
        %v2471 = vadd.f32 %v2246, %v2470
        %v2472 = vpop.f32.mrb[0].mxu0
        %v2473 = vadd.f32 %v2248, %v2472
        %2474 = vmatprep.mubr.f32.mxu0 0.0
        %v2475 = vand.u32 %v256, 4294901760
        %2476 = vmatmul.mubr.f32.gmra.mrb[0].mxu0 %v2475
        %v2477 = vpop.f32.mrb[0].mxu0
        %v2478 = vadd.f32 %v2255, %v2477
        %v2479 = vpop.f32.mrb[0].mxu0
        %v2480 = vadd.f32 %v2257, %v2479
        %2481 = vmatprep.mubr.f32.mxu0 0.0
        %v2482 = vand.u32 %v257, 4294901760
        %2483 = vmatmul.mubr.f32.gmra.mrb[0].mxu0 %v2482
        %v2484 = vpop.f32.mrb[0].mxu0
        %v2485 = vadd.f32 %v2264, %v2484
        %v2486 = vpop.f32.mrb[0].mxu0
        %v2487 = vadd.f32 %v2266, %v2486
        %2488 = vmatprep.mubr.f32.mxu0 0.0
        %v2489 = vand.u32 %v258, 4294901760
        %2490 = vmatmul.mubr.f32.gmra.mrb[0].mxu0 %v2489
        %v2491 = vpop.f32.mrb[0].mxu0
        %v2492 = vadd.f32 %v2273, %v2491
        %v2493 = vpop.f32.mrb[0].mxu0
        %v2494 = vadd.f32 %v2275, %v2493
        %2495 = vmatprep.mubr.f32.mxu0 0.0
        %v2496 = vand.u32 %v259, 4294901760
        %2497 = vmatmul.mubr.f32.gmra.mrb[0].mxu0 %v2496
        %v2498 = vpop.f32.mrb[0].mxu0
        %v2499 = vadd.f32 %v2282, %v2498
        %v2500 = vpop.f32.mrb[0].mxu0
        %v2501 = vadd.f32 %v2284, %v2500
        %2502 = vdwg.mxu0
        %2503 = vmatprep.subr.mxu0 0.0
        %v2504 = vand.u32 %v211, 4294901760
        %2505 = vmatpush1.xpose.msra.mxu0 %v2504
        %2506 = vmatprep.subr.mxu0 0.0
        %v2507 = vand.u32 %v212, 4294901760
        %2508 = vmatpush1.xpose.msra.mxu0 %v2507
        %2509 = vmatprep.subr.mxu0 0.0
        %v2510 = vand.u32 %v213, 4294901760
        %2511 = vmatpush1.xpose.msra.mxu0 %v2510
        %2512 = vmatprep.subr.mxu0 0.0
        %v2513 = vand.u32 %v214, 4294901760
        %2514 = vmatpush1.xpose.msra.mxu0 %v2513
        %2515 = vmatprep.subr.mxu0 0.0
        %v2516 = vand.u32 %v215, 4294901760
        %2517 = vmatpush1.xpose.msra.mxu0 %v2516
        %2518 = vmatprep.subr.mxu0 0.0
        %v2519 = vand.u32 %v216, 4294901760
        %2520 = vmatpush1.xpose.msra.mxu0 %v2519
        %2521 = vmatprep.subr.mxu0 0.0
        %v2522 = vand.u32 %v217, 4294901760
        %2523 = vmatpush1.xpose.msra.mxu0 %v2522
        %2524 = vmatprep.subr.mxu0 0.0
        %v2525 = vand.u32 %v218, 4294901760
        %2526 = vmatpush1.xpose.msra.mxu0 %v2525
        %2527 = vmatprep.subr.mxu0 0.0
        %v2528 = vand.u32 %v219, 4294901760
        %2529 = vmatpush1.xpose.msra.mxu0 %v2528
        %2530 = vmatprep.subr.mxu0 0.0
        %v2531 = vand.u32 %v220, 4294901760
        %2532 = vmatpush1.xpose.msra.mxu0 %v2531
        %2533 = vmatprep.subr.mxu0 0.0
        %v2534 = vand.u32 %v221, 4294901760
        %2535 = vmatpush1.xpose.msra.mxu0 %v2534
        %2536 = vmatprep.subr.mxu0 0.0
        %v2537 = vand.u32 %v222, 4294901760
        %2538 = vmatpush1.xpose.msra.mxu0 %v2537
        %2539 = vmatprep.subr.mxu0 0.0
        %v2540 = vand.u32 %v223, 4294901760
        %2541 = vmatpush1.xpose.msra.mxu0 %v2540
        %2542 = vmatprep.subr.mxu0 0.0
        %v2543 = vand.u32 %v224, 4294901760
        %2544 = vmatpush1.xpose.msra.mxu0 %v2543
        %2545 = vmatprep.subr.mxu0 0.0
        %v2546 = vand.u32 %v225, 4294901760
        %2547 = vmatpush1.xpose.msra.mxu0 %v2546
        %2548 = vmatprep.subr.mxu0 0.0
        %v2549 = vand.u32 %v226, 4294901760
        %2550 = vmatpush1.xpose.msra.mxu0 %v2549
        %2551 = vmatprep.subr.mxu0 0.0
        %v2552 = vand.u32 %v227, 4294901760
        %2553 = vmatpush1.xpose.msra.mxu0 %v2552
        %2554 = vmatprep.subr.mxu0 0.0
        %v2555 = vand.u32 %v228, 4294901760
        %2556 = vmatpush1.xpose.msra.mxu0 %v2555
        %2557 = vmatprep.subr.mxu0 0.0
        %v2558 = vand.u32 %v229, 4294901760
        %2559 = vmatpush1.xpose.msra.mxu0 %v2558
        %2560 = vmatprep.subr.mxu0 0.0
        %v2561 = vand.u32 %v230, 4294901760
        %2562 = vmatpush1.xpose.msra.mxu0 %v2561
        %2563 = vmatprep.subr.mxu0 0.0
        %v2564 = vand.u32 %v231, 4294901760
        %2565 = vmatpush1.xpose.msra.mxu0 %v2564
        %2566 = vmatprep.subr.mxu0 0.0
        %v2567 = vand.u32 %v232, 4294901760
        %2568 = vmatpush1.xpose.msra.mxu0 %v2567
        %2569 = vmatprep.subr.mxu0 0.0
        %v2570 = vand.u32 %v233, 4294901760
        %2571 = vmatpush1.xpose.msra.mxu0 %v2570
        %2572 = vmatprep.subr.mxu0 0.0
        %v2573 = vand.u32 %v234, 4294901760
        %2574 = vmatpush1.xpose.msra.mxu0 %v2573
        %2575 = vmatprep.subr.mxu0 0.0
        %v2576 = vand.u32 %v235, 4294901760
        %2577 = vmatpush1.xpose.msra.mxu0 %v2576
        %2578 = vmatprep.subr.mxu0 0.0
        %v2579 = vand.u32 %v236, 4294901760
        %2580 = vmatpush1.xpose.msra.mxu0 %v2579
        %2581 = vmatprep.subr.mxu0 0.0
        %v2582 = vand.u32 %v237, 4294901760
        %2583 = vmatpush1.xpose.msra.mxu0 %v2582
        %2584 = vmatprep.subr.mxu0 0.0
        %v2585 = vand.u32 %v238, 4294901760
        %2586 = vmatpush1.xpose.msra.mxu0 %v2585
        %2587 = vmatprep.subr.mxu0 0.0
        %v2588 = vand.u32 %v239, 4294901760
        %2589 = vmatpush1.xpose.msra.mxu0 %v2588
        %2590 = vmatprep.subr.mxu0 0.0
        %v2591 = vand.u32 %v240, 4294901760
        %2592 = vmatpush1.xpose.msra.mxu0 %v2591
        %2593 = vmatprep.subr.mxu0 0.0
        %v2594 = vand.u32 %v241, 4294901760
        %2595 = vmatpush1.xpose.msra.mxu0 %v2594
        %2596 = vmatprep.subr.mxu0 0.0
        %v2597 = vand.u32 %v242, 4294901760
        %2598 = vmatpush1.xpose.msra.mxu0 %v2597
        %2599 = vmatprep.mubr.f32.mxu0 0.0
        %v2600 = vand.u32 %v252, 4294901760
        %2601 = vmatmul.mubr.f32.gmra.mrb[0].mxu0 %v2600
        %v2602 = vpop.f32.mrb[0].mxu0
        %v2603 = vadd.f32 %v2450, %v2602
        %v2604 = vpop.f32.mrb[0].mxu0
        %v2605 = vadd.f32 %v2452, %v2604
        %2606 = vmatprep.mubr.f32.mxu0 0.0
        %v2607 = vand.u32 %v253, 4294901760
        %2608 = vmatmul.mubr.f32.gmra.mrb[0].mxu0 %v2607
        %v2609 = vpop.f32.mrb[0].mxu0
        %v2610 = vadd.f32 %v2457, %v2609
        %v2611 = vpop.f32.mrb[0].mxu0
        %v2612 = vadd.f32 %v2459, %v2611
        %2613 = vmatprep.mubr.f32.mxu0 0.0
        %v2614 = vand.u32 %v254, 4294901760
        %2615 = vmatmul.mubr.f32.gmra.mrb[0].mxu0 %v2614
        %v2616 = vpop.f32.mrb[0].mxu0
        %v2617 = vadd.f32 %v2464, %v2616
        %v2618 = vpop.f32.mrb[0].mxu0
        %v2619 = vadd.f32 %v2466, %v2618
        %2620 = vmatprep.mubr.f32.mxu0 0.0
        %v2621 = vand.u32 %v255, 4294901760
        %2622 = vmatmul.mubr.f32.gmra.mrb[0].mxu0 %v2621
        %v2623 = vpop.f32.mrb[0].mxu0
        %v2624 = vadd.f32 %v2471, %v2623
        %v2625 = vpop.f32.mrb[0].mxu0
        %v2626 = vadd.f32 %v2473, %v2625
        %2627 = vmatprep.mubr.f32.mxu0 0.0
        %v2628 = vand.u32 %v256, 4294901760
        %2629 = vmatmul.mubr.f32.gmra.mrb[0].mxu0 %v2628
        %v2630 = vpop.f32.mrb[0].mxu0
        %v2631 = vadd.f32 %v2478, %v2630
        %v2632 = vpop.f32.mrb[0].mxu0
        %v2633 = vadd.f32 %v2480, %v2632
        %2634 = vmatprep.mubr.f32.mxu0 0.0
        %v2635 = vand.u32 %v257, 4294901760
        %2636 = vmatmul.mubr.f32.gmra.mrb[0].mxu0 %v2635
        %v2637 = vpop.f32.mrb[0].mxu0
        %v2638 = vadd.f32 %v2485, %v2637
        %v2639 = vpop.f32.mrb[0].mxu0
        %v2640 = vadd.f32 %v2487, %v2639
        %2641 = vmatprep.mubr.f32.mxu0 0.0
        %v2642 = vand.u32 %v258, 4294901760
        %2643 = vmatmul.mubr.f32.gmra.mrb[0].mxu0 %v2642
        %v2644 = vpop.f32.mrb[0].mxu0
        %v2645 = vadd.f32 %v2492, %v2644
        %v2646 = vpop.f32.mrb[0].mxu0
        %v2647 = vadd.f32 %v2494, %v2646
        %2648 = vmatprep.mubr.f32.mxu0 0.0
        %v2649 = vand.u32 %v259, 4294901760
        %2650 = vmatmul.mubr.f32.gmra.mrb[0].mxu0 %v2649
        %v2651 = vpop.f32.mrb[0].mxu0
        %v2652 = vadd.f32 %v2499, %v2651
        %v2653 = vpop.f32.mrb[0].mxu0
        %v2654 = vadd.f32 %v2501, %v2653
        %2655 = vdwg.mxu0
        %v2656 = vmul.f32 %v1405, %v1405
        %v2657 = vmul.f32 %v1407, %v1407
        %v2658 = vmul.f32 %v1412, %v1412
        %v2659 = vmul.f32 %v1414, %v1414
        %v2660 = vmul.f32 %v1419, %v1419
        %v2661 = vmul.f32 %v1421, %v1421
        %v2662 = vmul.f32 %v1426, %v1426
        %v2663 = vmul.f32 %v1428, %v1428
        %v2664 = vmul.f32 %v1433, %v1433
        %v2665 = vmul.f32 %v1435, %v1435
        %v2666 = vmul.f32 %v1440, %v1440
        %v2667 = vmul.f32 %v1442, %v1442
        %v2668 = vmul.f32 %v1447, %v1447
        %v2669 = vmul.f32 %v1449, %v1449
        %v2670 = vmul.f32 %v1454, %v1454
        %v2671 = vmul.f32 %v1456, %v1456
        %v2672 = vmul.f32 %v2603, %v2603
        %v2673 = vmul.f32 %v2605, %v2605
        %v2674 = vmul.f32 %v2610, %v2610
        %v2675 = vmul.f32 %v2612, %v2612
        %v2676 = vmul.f32 %v2617, %v2617
        %v2677 = vmul.f32 %v2619, %v2619
        %v2678 = vmul.f32 %v2624, %v2624
        %v2679 = vmul.f32 %v2626, %v2626
        %v2680 = vmul.f32 %v2631, %v2631
        %v2681 = vmul.f32 %v2633, %v2633
        %v2682 = vmul.f32 %v2638, %v2638
        %v2683 = vmul.f32 %v2640, %v2640
        %v2684 = vmul.f32 %v2645, %v2645
        %v2685 = vmul.f32 %v2647, %v2647
        %v2686 = vmul.f32 %v2652, %v2652
        %v2687 = vmul.f32 %v2654, %v2654
        %v2688 = vadd.f32 %v2656, %v2672
        %v2689 = vadd.f32 %v2657, %v2673
        %v2690 = vadd.f32 %v2658, %v2674
        %v2691 = vadd.f32 %v2659, %v2675
        %v2692 = vadd.f32 %v2660, %v2676
        %v2693 = vadd.f32 %v2661, %v2677
        %v2694 = vadd.f32 %v2662, %v2678
        %v2695 = vadd.f32 %v2663, %v2679
        %v2696 = vadd.f32 %v2664, %v2680
        %v2697 = vadd.f32 %v2665, %v2681
        %v2698 = vadd.f32 %v2666, %v2682
        %v2699 = vadd.f32 %v2667, %v2683
        %v2700 = vadd.f32 %v2668, %v2684
        %v2701 = vadd.f32 %v2669, %v2685
        %v2702 = vadd.f32 %v2670, %v2686
        %v2703 = vadd.f32 %v2671, %v2687
        %v2704 = vadd.f32 %v2688, 1e-12
        %v2705 = vadd.f32 %v2689, 1e-12
        %v2706 = vadd.f32 %v2690, 1e-12
        %v2707 = vadd.f32 %v2691, 1e-12
        %v2708 = vadd.f32 %v2692, 1e-12
        %v2709 = vadd.f32 %v2693, 1e-12
        %v2710 = vadd.f32 %v2694, 1e-12
        %v2711 = vadd.f32 %v2695, 1e-12
        %v2712 = vadd.f32 %v2696, 1e-12
        %v2713 = vadd.f32 %v2697, 1e-12
        %v2714 = vadd.f32 %v2698, 1e-12
        %v2715 = vadd.f32 %v2699, 1e-12
        %v2716 = vadd.f32 %v2700, 1e-12
        %v2717 = vadd.f32 %v2701, 1e-12
        %v2718 = vadd.f32 %v2702, 1e-12
        %v2719 = vadd.f32 %v2703, 1e-12
        %v2720 = vlog2.pop %v2704
        %v2721 = vmul.f32 %v2720, 0.6931472
        %v2722 = vlog2.pop %v2705
        %v2723 = vmul.f32 %v2722, 0.6931472
        %v2724 = vlog2.pop %v2706
        %v2725 = vmul.f32 %v2724, 0.6931472
        %v2726 = vlog2.pop %v2707
        %v2727 = vmul.f32 %v2726, 0.6931472
        %v2728 = vlog2.pop %v2708
        %v2729 = vmul.f32 %v2728, 0.6931472
        %v2730 = vlog2.pop %v2709
        %v2731 = vmul.f32 %v2730, 0.6931472
        %v2732 = vlog2.pop %v2710
        %v2733 = vmul.f32 %v2732, 0.6931472
        %v2734 = vlog2.pop %v2711
        %v2735 = vmul.f32 %v2734, 0.6931472
        %v2736 = vlog2.pop %v2712
        %v2737 = vmul.f32 %v2736, 0.6931472
        %v2738 = vlog2.pop %v2713
        %v2739 = vmul.f32 %v2738, 0.6931472
        %v2740 = vlog2.pop %v2714
        %v2741 = vmul.f32 %v2740, 0.6931472
        %v2742 = vlog2.pop %v2715
        %v2743 = vmul.f32 %v2742, 0.6931472
        %v2744 = vlog2.pop %v2716
        %v2745 = vmul.f32 %v2744, 0.6931472
        %v2746 = vlog2.pop %v2717
        %v2747 = vmul.f32 %v2746, 0.6931472
        %v2748 = vlog2.pop %v2718
        %v2749 = vmul.f32 %v2748, 0.6931472
        %v2750 = vlog2.pop %v2719
        %v2751 = vmul.f32 %v2750, 0.6931472
        %v2752 = vmul.f32 %v2721, 0.35
        %v2753 = vmul.f32 %v2723, 0.35
        %v2754 = vmul.f32 %v2725, 0.35
        %v2755 = vmul.f32 %v2727, 0.35
        %v2756 = vmul.f32 %v2729, 0.35
        %v2757 = vmul.f32 %v2731, 0.35
        %v2758 = vmul.f32 %v2733, 0.35
        %v2759 = vmul.f32 %v2735, 0.35
        %v2760 = vmul.f32 %v2737, 0.35
        %v2761 = vmul.f32 %v2739, 0.35
        %v2762 = vmul.f32 %v2741, 0.35
        %v2763 = vmul.f32 %v2743, 0.35
        %v2764 = vmul.f32 %v2745, 0.35
        %v2765 = vmul.f32 %v2747, 0.35
        %v2766 = vmul.f32 %v2749, 0.35
        %v2767 = vmul.f32 %v2751, 0.35
        %v2768 = vmul.f32 %v2752, 1.442695
        %v2769 = vpow.pop %v2768
        %v2770 = vmul.f32 %v2753, 1.442695
        %v2771 = vpow.pop %v2770
        %v2772 = vmul.f32 %v2754, 1.442695
        %v2773 = vpow.pop %v2772
        %v2774 = vmul.f32 %v2755, 1.442695
        %v2775 = vpow.pop %v2774
        %v2776 = vmul.f32 %v2756, 1.442695
        %v2777 = vpow.pop %v2776
        %v2778 = vmul.f32 %v2757, 1.442695
        %v2779 = vpow.pop %v2778
        %v2780 = vmul.f32 %v2758, 1.442695
        %v2781 = vpow.pop %v2780
        %v2782 = vmul.f32 %v2759, 1.442695
        %v2783 = vpow.pop %v2782
        %v2784 = vmul.f32 %v2760, 1.442695
        %v2785 = vpow.pop %v2784
        %v2786 = vmul.f32 %v2761, 1.442695
        %v2787 = vpow.pop %v2786
        %v2788 = vmul.f32 %v2762, 1.442695
        %v2789 = vpow.pop %v2788
        %v2790 = vmul.f32 %v2763, 1.442695
        %v2791 = vpow.pop %v2790
        %v2792 = vmul.f32 %v2764, 1.442695
        %v2793 = vpow.pop %v2792
        %v2794 = vmul.f32 %v2765, 1.442695
        %v2795 = vpow.pop %v2794
        %v2796 = vmul.f32 %v2766, 1.442695
        %v2797 = vpow.pop %v2796
        %v2798 = vmul.f32 %v2767, 1.442695
        %v2799 = vpow.pop %v2798
        %v2800 = vadd.f32 %v2769, 1e-12
        %v2801 = vadd.f32 %v2771, 1e-12
        %v2802 = vadd.f32 %v2773, 1e-12
        %v2803 = vadd.f32 %v2775, 1e-12
        %v2804 = vadd.f32 %v2777, 1e-12
        %v2805 = vadd.f32 %v2779, 1e-12
        %v2806 = vadd.f32 %v2781, 1e-12
        %v2807 = vadd.f32 %v2783, 1e-12
        %v2808 = vadd.f32 %v2785, 1e-12
        %v2809 = vadd.f32 %v2787, 1e-12
        %v2810 = vadd.f32 %v2789, 1e-12
        %v2811 = vadd.f32 %v2791, 1e-12
        %v2812 = vadd.f32 %v2793, 1e-12
        %v2813 = vadd.f32 %v2795, 1e-12
        %v2814 = vadd.f32 %v2797, 1e-12
        %v2815 = vadd.f32 %v2799, 1e-12
        %v2816 = vrcp.pop %v2800
        %v2817 = vmul.f32 1.0, %v2816
        %v2818 = vrcp.pop %v2801
        %v2819 = vmul.f32 1.0, %v2818
        %v2820 = vrcp.pop %v2802
        %v2821 = vmul.f32 1.0, %v2820
        %v2822 = vrcp.pop %v2803
        %v2823 = vmul.f32 1.0, %v2822
        %v2824 = vrcp.pop %v2804
        %v2825 = vmul.f32 1.0, %v2824
        %v2826 = vrcp.pop %v2805
        %v2827 = vmul.f32 1.0, %v2826
        %v2828 = vrcp.pop %v2806
        %v2829 = vmul.f32 1.0, %v2828
        %v2830 = vrcp.pop %v2807
        %v2831 = vmul.f32 1.0, %v2830
        %v2832 = vrcp.pop %v2808
        %v2833 = vmul.f32 1.0, %v2832
        %v2834 = vrcp.pop %v2809
        %v2835 = vmul.f32 1.0, %v2834
        %v2836 = vrcp.pop %v2810
        %v2837 = vmul.f32 1.0, %v2836
        %v2838 = vrcp.pop %v2811
        %v2839 = vmul.f32 1.0, %v2838
        %v2840 = vrcp.pop %v2812
        %v2841 = vmul.f32 1.0, %v2840
        %v2842 = vrcp.pop %v2813
        %v2843 = vmul.f32 1.0, %v2842
        %v2844 = vrcp.pop %v2814
        %v2845 = vmul.f32 1.0, %v2844
        %v2846 = vrcp.pop %v2815
        %v2847 = vmul.f32 1.0, %v2846
        %v2848 = vmul.f32 %v1405, %v2817
        %v2849 = vmul.f32 %v1407, %v2819
        %v2850 = vmul.f32 %v1412, %v2821
        %v2851 = vmul.f32 %v1414, %v2823
        %v2852 = vmul.f32 %v1419, %v2825
        %v2853 = vmul.f32 %v1421, %v2827
        %v2854 = vmul.f32 %v1426, %v2829
        %v2855 = vmul.f32 %v1428, %v2831
        %v2856 = vmul.f32 %v1433, %v2833
        %v2857 = vmul.f32 %v1435, %v2835
        %v2858 = vmul.f32 %v1440, %v2837
        %v2859 = vmul.f32 %v1442, %v2839
        %v2860 = vmul.f32 %v1447, %v2841
        %v2861 = vmul.f32 %v1449, %v2843
        %v2862 = vmul.f32 %v1454, %v2845
        %v2863 = vmul.f32 %v1456, %v2847
        %2864 = vst [vmem:[%s207] sm:$0xff] %v2848
        %2865 = vst [vmem:[%s207 + $0x8] sm:$0xff] %v2849
        %2866 = vst [vmem:[%s207 + $0x10] sm:$0xff] %v2850
        %2867 = vst [vmem:[%s207 + $0x18] sm:$0xff] %v2851
        %2868 = vst [vmem:[%s207 + $0x20] sm:$0xff] %v2852
        %2869 = vst [vmem:[%s207 + $0x28] sm:$0xff] %v2853
        %2870 = vst [vmem:[%s207 + $0x30] sm:$0xff] %v2854
        %2871 = vst [vmem:[%s207 + $0x38] sm:$0xff] %v2855
        %2872 = vst [vmem:[%s207 + $0x40] sm:$0xff] %v2856
        %2873 = vst [vmem:[%s207 + $0x48] sm:$0xff] %v2857
        %2874 = vst [vmem:[%s207 + $0x50] sm:$0xff] %v2858
        %2875 = vst [vmem:[%s207 + $0x58] sm:$0xff] %v2859
        %2876 = vst [vmem:[%s207 + $0x60] sm:$0xff] %v2860
        %2877 = vst [vmem:[%s207 + $0x68] sm:$0xff] %v2861
        %2878 = vst [vmem:[%s207 + $0x70] sm:$0xff] %v2862
        %2879 = vst [vmem:[%s207 + $0x78] sm:$0xff] %v2863
        %v2880 = vmul.f32 %v2603, %v2817
        %v2881 = vmul.f32 %v2605, %v2819
        %v2882 = vmul.f32 %v2610, %v2821
        %v2883 = vmul.f32 %v2612, %v2823
        %v2884 = vmul.f32 %v2617, %v2825
        %v2885 = vmul.f32 %v2619, %v2827
        %v2886 = vmul.f32 %v2624, %v2829
        %v2887 = vmul.f32 %v2626, %v2831
        %v2888 = vmul.f32 %v2631, %v2833
        %v2889 = vmul.f32 %v2633, %v2835
        %v2890 = vmul.f32 %v2638, %v2837
        %v2891 = vmul.f32 %v2640, %v2839
        %v2892 = vmul.f32 %v2645, %v2841
        %v2893 = vmul.f32 %v2647, %v2843
        %v2894 = vmul.f32 %v2652, %v2845
        %v2895 = vmul.f32 %v2654, %v2847
        %s2896 = scalar_lea.vmem %s207, 128 [#allocation7]
        %2897 = vst [vmem:[%s2896] sm:$0xff] %v2880
        %2898 = vst [vmem:[%s2896 + $0x8] sm:$0xff] %v2881
        %2899 = vst [vmem:[%s2896 + $0x10] sm:$0xff] %v2882
        %2900 = vst [vmem:[%s2896 + $0x18] sm:$0xff] %v2883
        %2901 = vst [vmem:[%s2896 + $0x20] sm:$0xff] %v2884
        %2902 = vst [vmem:[%s2896 + $0x28] sm:$0xff] %v2885
        %2903 = vst [vmem:[%s2896 + $0x30] sm:$0xff] %v2886
        %2904 = vst [vmem:[%s2896 + $0x38] sm:$0xff] %v2887
        %2905 = vst [vmem:[%s2896 + $0x40] sm:$0xff] %v2888
        %2906 = vst [vmem:[%s2896 + $0x48] sm:$0xff] %v2889
        %2907 = vst [vmem:[%s2896 + $0x50] sm:$0xff] %v2890
        %2908 = vst [vmem:[%s2896 + $0x58] sm:$0xff] %v2891
        %2909 = vst [vmem:[%s2896 + $0x60] sm:$0xff] %v2892
        %2910 = vst [vmem:[%s2896 + $0x68] sm:$0xff] %v2893
        %2911 = vst [vmem:[%s2896 + $0x70] sm:$0xff] %v2894
        %2912 = vst [vmem:[%s2896 + $0x78] sm:$0xff] %v2895
        %s2913 = sand.u32 %s102, 1
        %s2914 = scalar_lea.sflag [#allocation4], %s2913
        %s2915 = sand.u32 %s102, 1
        %s2916 = smul.addr %s2915, 256
        %s2917 = scalar_lea.vmem [#allocation7], %s2916
        // Predicated region
        $region37: #{_fe_call.1} parent=27 // pred_check
          %p2918 = pneg %p112
        $region38: #{_fe_call.1} parent=27 // pred_check_branch
          %2920 = sbr.rel (%p2918) target = $region40
        $region39: #{_fe_call.1} parent=27 // pred_region
          #allocation9 [shape = 'u32[6]{0}', space=smem, size = 0x18, scoped, tag = 'DMA stride descriptor']
          %s2921 = smul.u32 8, %s27
          %s2922 = smul.u32 2, %s26
          %s2924 = ssub.s32 4096, 4096
          %2925 = vsyncadd %s2914, %s2924
          %s2926 = smul.addr %s2921, 2
          %s2927 = sadd.s32 %s2922, %s2926
          %s2928 = smul.addr %s25, 64
          %s2929 = sadd.s32 %s2927, %s2928
          %s2930 = smul.addr %s2929, 128
          %s2931 = scalar_lea.hbm %s2, %s2930
          %s2933 = sshll.u32 1, 14
          %s2934 = sxor.u32 4294967295, %s2933
          %s2937 = sshll.u32 7, 18
          %s2938 = sxor.u32 4294967295, %s2937
          %s2939 = sand.u32 0, %s2938
          %s2941 = sor.u32 %s2939, 0
          %s2943 = sshll.u32 3, 24
          %s2944 = sxor.u32 4294967295, %s2943
          %s2945 = sand.u32 %s2941, %s2944
          %s2947 = sor.u32 %s2945, 0
          %s2948 = sshll.u32 %s2917, 4
          %s2949 = int_to_ptr.vmem [resolvable:$true] %s2948
          %2955 = sst [smem:[#allocation9]] 2048
          %s2956 = scalar_lea.smem [#allocation9], 1
          %2957 = sst [smem:[%s2956]] 4096
          %s2958 = scalar_lea.smem [#allocation9], 2
          %2959 = sst [smem:[%s2958]] 8
          %s2960 = scalar_lea.smem [#allocation9], 3
          %2961 = sst [smem:[%s2960]] 256
          %s2962 = scalar_lea.smem [#allocation9], 4
          %2963 = sst [smem:[%s2962]] 256
          %s2964 = scalar_lea.smem [#allocation9], 5
          %2965 = sst [smem:[%s2964]] 16
          %2967 = dma.general %s2949, 4096, %s2931, %s2914, [#allocation8], [#allocation9], %s2947, 0
        $region40: #{_fe_call.1} parent=27 // pred_fallthru
          _
      $region28: #{_fe_call.1} parent=5 // pred_fallthru
        _
      %p2968 = scmp.le.s32.totalorder 2, %s15
      // Predicated region
      $region41: #{_fe_call.1} parent=5 // pred_check
        %p2969 = pneg %p2968
      $region42: #{_fe_call.1} parent=5 // pred_check_branch
        %2971 = sbr.rel (%p2969) target = $region44
      $region43: #{_fe_call.1} parent=5 // pred_region
        %s2972 = ssub.s32 %s15, 2
        // Predicated region
        $region45: #{_fe_call.1} parent=43 // pred_check
          %p2973 = pneg %p118
        $region46: #{_fe_call.1} parent=43 // pred_check_branch
          %2975 = sbr.rel (%p2973) target = $region48
        $region47: #{_fe_call.1} parent=43 // pred_region
          %s2976 = sand.u32 %s103, 1
          %s2977 = scalar_lea.sflag [#allocation4], %s2976
          %s2978 = sand.u32 %s103, 1
          %s2979 = smul.addr %s2978, 256
          %s2980 = scalar_lea.vmem [#allocation7], %s2979
          %2981 = dma.done %s2977, 4096
        $region48: #{_fe_call.1} parent=43 // pred_fallthru
          _
      $region44: #{_fe_call.1} parent=5 // pred_fallthru
        _
    $region6: #{_fe_call.1} parent=1 // loop_footer
      %s19 = sadd.s32 1, %s15
    $region7: #{_fe_call.1} parent=1 // loop_footer_branch
      %14 = sbr.rel target = $region3
    $region8: #{_fe_call.1} parent=1 // loop_exit
      _
    %2982 = vsyncpa [#allocation3], 1
    %s2983 = scalar_lea.sflag [#allocation3], 1
    %2984 = vsyncpa %s2983, 1
    %2985 = vsyncpa [#allocation6], 1
    %s2986 = scalar_lea.sflag [#allocation6], 1
    %2987 = vsyncpa %s2986, 1
    %2988 = vsyncpa [#allocation4], 1
    %s2989 = scalar_lea.sflag [#allocation4], 1
    %2990 = vsyncpa %s2989, 1

</llo_original>
